<compile_context>
chip_gen: v7x
topology: tpu7x:2x2x1
jax: 0.10.0
libtpu: 0.0.40
codegen_flags: <defaults>
</compile_context>

<pallas_src>
import math

import jax
import jax.numpy as jnp
from jax.experimental import pallas as pl
from jax.experimental.pallas import tpu as pltpu


def _make_mha_kernel(num_heads: int, d_k: int, scale: float,
                     has_mask: bool, mask_heads: int, matmul_dtype):
    """Builds the fused MHA kernel body. Grid = (batch,)."""
    H, dk = num_heads, d_k

    def mm(a, b):
        # MXU matmul; operands optionally cast (bf16 path), accumulation always f32.
        return jnp.dot(a.astype(matmul_dtype), b.astype(matmul_dtype),
                       preferred_element_type=jnp.float32)

    def kernel(*refs):
        if has_mask:
            (q_ref, k_ref, v_ref, mask_ref,
             wq_ref, bq_ref, wk_ref, bk_ref, wv_ref, bv_ref,
             wo_ref, bo_ref, o_ref) = refs
        else:
            (q_ref, k_ref, v_ref,
             wq_ref, bq_ref, wk_ref, bk_ref, wv_ref, bv_ref,
             wo_ref, bo_ref, o_ref) = refs

        q = q_ref[0]   # (Sq, Dd)
        k = k_ref[0]   # (Sk, De)
        v = v_ref[0]   # (Sk, De)

        # ---- Full-width projections (hoisted out of the head loop) ----
        # 1/sqrt(dk) folded into the projected Q (bias included -> algebraically
        # identical to scaling the scores).
        qp = (mm(q, wq_ref[...]) + bq_ref[...]) * scale    # (Sq, Dd) f32
        kp = mm(k, wk_ref[...]) + bk_ref[...]              # (Sk, Dd) f32
        vp = mm(v, wv_ref[...]) + bv_ref[...]              # (Sk, Dd) f32

        acc = None
        # Statically unrolled head loop (H is a small static int); lane slices of the
        # full-width projections replace per-head projection matmuls.
        for h in range(H):
            qh = qp[:, h * dk:(h + 1) * dk]                # (Sq, dk)
            kh = kp[:, h * dk:(h + 1) * dk]                # (Sk, dk)
            vh = vp[:, h * dk:(h + 1) * dk]                # (Sk, dk)

            s = jnp.einsum('qd,kd->qk',
                           qh.astype(matmul_dtype), kh.astype(matmul_dtype),
                           preferred_element_type=jnp.float32)   # (Sq, Sk)
            if has_mask:
                m = mask_ref[0, 0] if mask_heads == 1 else mask_ref[0, h]
                s = jnp.where(m == 0, -1e9, s)

            # Softmax in f32 with deferred normalisation: divide the (Sq, dk)
            # context, not the (Sq, Sk) probabilities.
            s_max = jnp.max(s, axis=-1, keepdims=True)
            p = jnp.exp(s - s_max)
            l = jnp.sum(p, axis=-1, keepdims=True)
            ctx = mm(p, vh) / l                            # (Sq, dk)

            # Output projection: this head's contribution of W_o(combine_heads(.)).
            contrib = mm(ctx, wo_ref[h])                   # (Sq, Dd)
            acc = contrib if acc is None else acc + contrib

        o_ref[0] = (acc + bo_ref[...]).astype(o_ref.dtype)

    return kernel


def init_mha_params(key, dim_encoder: int, dim_decoder: int, dtype=jnp.float32):
    """Linear-layer parameters, stored as (in_features, out_features) matrices."""
    ks = jax.random.split(key, 8)
    s = 0.1
    wq = s * jax.random.normal(ks[0], (dim_decoder, dim_decoder), dtype)
    bq = s * jax.random.normal(ks[1], (dim_decoder,), dtype)
    wk = s * jax.random.normal(ks[2], (dim_encoder, dim_decoder), dtype)
    bk = s * jax.random.normal(ks[3], (dim_decoder,), dtype)
    wv = s * jax.random.normal(ks[4], (dim_encoder, dim_decoder), dtype)
    bv = s * jax.random.normal(ks[5], (dim_decoder,), dtype)
    wo = s * jax.random.normal(ks[6], (dim_decoder, dim_decoder), dtype)
    bo = s * jax.random.normal(ks[7], (dim_decoder,), dtype)
    return (wq, bq, wk, bk, wv, bv, wo, bo)


def multi_head_attention_forward(Q, K, V, params, num_heads: int, mask=None, *,
                                 use_bf16_matmul: bool = False,
                                 vmem_limit_bytes: int = 48 * 1024 * 1024):
    """Fused MHA forward. Q: (B, Sq, Dd); K, V: (B, Sk, De);
    mask broadcastable against (B, H, Sq, Sk) scores (e.g. (Sq, Sk) causal)."""
    wq, bq, wk, bk, wv, bv, wo, bo = params
    B, Sq, Dd = Q.shape
    Bk, Sk, De = K.shape
    H = num_heads
    assert Dd % H == 0, "dim_decoder must be divisible by num_heads"
    assert Bk == B and V.shape == K.shape
    dk = Dd // H
    scale = 1.0 / math.sqrt(dk)

    # ---- wrapper-side layout plumbing: pure reshapes only (no transposes) ----
    wo_h = wo.reshape(H, dk, Dd)                 # head-major rows of W_o
    bq2 = bq.reshape(1, Dd)
    bk2 = bk.reshape(1, Dd)
    bv2 = bv.reshape(1, Dd)
    bo2 = bo.reshape(1, Dd)

    in_specs = [
        pl.BlockSpec((1, Sq, Dd), lambda b: (b, 0, 0)),   # Q
        pl.BlockSpec((1, Sk, De), lambda b: (b, 0, 0)),   # K
        pl.BlockSpec((1, Sk, De), lambda b: (b, 0, 0)),   # V
    ]
    args = [Q, K, V]

    has_mask = mask is not None
    mask_heads = 1
    if has_mask:
        m = jnp.asarray(mask)
        if m.ndim == 2:
            m = m[None, None]                    # (1, 1, Sq, Sk)
        elif m.ndim == 3:
            m = m[:, None]                       # (B, 1, Sq, Sk)
        assert m.ndim == 4 and m.shape[2:] == (Sq, Sk)
        Bm, mask_heads = int(m.shape[0]), int(m.shape[1])
        m = m.astype(jnp.int32)                  # compact, no (B,H,..) f32 blow-up
        if Bm > 1:
            mask_index = lambda b: (b, 0, 0, 0)
        else:
            mask_index = lambda b: (0, 0, 0, 0)
        in_specs.append(pl.BlockSpec((1, mask_heads, Sq, Sk), mask_index))
        args.append(m)

    in_specs += [
        pl.BlockSpec((Dd, Dd), lambda b: (0, 0)),         # W_q (full width, resident)
        pl.BlockSpec((1, Dd), lambda b: (0, 0)),          # b_q
        pl.BlockSpec((De, Dd), lambda b: (0, 0)),         # W_k
        pl.BlockSpec((1, Dd), lambda b: (0, 0)),          # b_k
        pl.BlockSpec((De, Dd), lambda b: (0, 0)),         # W_v
        pl.BlockSpec((1, Dd), lambda b: (0, 0)),          # b_v
        pl.BlockSpec((H, dk, Dd), lambda b: (0, 0, 0)),   # W_o, head-major rows
        pl.BlockSpec((1, Dd), lambda b: (0, 0)),          # b_o
    ]
    args += [wq, bq2, wk, bk2, wv, bv2, wo_h, bo2]

    matmul_dtype = jnp.bfloat16 if use_bf16_matmul else Q.dtype
    kernel = _make_mha_kernel(H, dk, scale, has_mask, mask_heads, matmul_dtype)

    return pl.pallas_call(
        kernel,
        out_shape=jax.ShapeDtypeStruct((B, Sq, Dd), Q.dtype),
        grid_spec=pltpu.PrefetchScalarGridSpec(
            num_scalar_prefetch=0,
            grid=(B,),
            in_specs=in_specs,
            out_specs=pl.BlockSpec((1, Sq, Dd), lambda b: (b, 0, 0)),
        ),
        compiler_params=pltpu.CompilerParams(
            dimension_semantics=("parallel",),
            # Explicit scoped-VMEM limit (re-derive per generation; kept under v7x's
            # 64 MiB physical while raising v5e/v6e's 16/32 MiB defaults).
            vmem_limit_bytes=vmem_limit_bytes,
        ),
    )(*args)


def mha_reference(Q, K, V, params, num_heads: int, mask=None):
    """Pure-JAX reference with identical semantics to the PyTorch module."""
    wq, bq, wk, bk, wv, bv, wo, bo = params
    B, Sq, Dd = Q.shape
    H = num_heads
    dk = Dd // H
    hp = jax.lax.Precision.HIGHEST

    q = jnp.einsum('bsi,io->bso', Q, wq, precision=hp) + bq
    k = jnp.einsum('bsi,io->bso', K, wk, precision=hp) + bk
    v = jnp.einsum('bsi,io->bso', V, wv, precision=hp) + bv

    def split(x):
        b, s, d = x.shape
        return x.reshape(b, s, H, dk).transpose(0, 2, 1, 3)

    qh, kh, vh = split(q), split(k), split(v)
    scores = jnp.einsum('bhqd,bhkd->bhqk', qh, kh, precision=hp) / math.sqrt(dk)
    if mask is not None:
        scores = jnp.where(mask == 0, -1e9, scores)
    probs = jax.nn.softmax(scores, axis=-1)
    ctx = jnp.einsum('bhqk,bhkd->bhqd', probs, vh, precision=hp)
    ctx = ctx.transpose(0, 2, 1, 3).reshape(B, Sq, Dd)
    return jnp.einsum('bsi,io->bso', ctx, wo, precision=hp) + bo


if __name__ == "__main__":
    # Small shapes consistent with the module: batch=2, seq=8, d_model=32, 4 heads.
    B, Sq, Sk = 2, 8, 8
    dim_encoder, dim_decoder, num_heads = 32, 32, 4

    key = jax.random.PRNGKey(0)
    kq, kk, kv, kp = jax.random.split(key, 4)
    Q = jax.random.normal(kq, (B, Sq, dim_decoder), dtype=jnp.float32)
    K = jax.random.normal(kk, (B, Sk, dim_encoder), dtype=jnp.float32)
    V = jax.random.normal(kv, (B, Sk, dim_encoder), dtype=jnp.float32)
    params = init_mha_params(kp, dim_encoder, dim_decoder)

    # --- mask=None path (f32) ---
    out = jax.block_until_ready(
        multi_head_attention_forward(Q, K, V, params, num_heads))
    ref = mha_reference(Q, K, V, params, num_heads)
    assert out.shape == (B, Sq, dim_decoder)
    assert jnp.allclose(out, ref, atol=1e-4, rtol=1e-3), "mismatch vs reference (no mask)"

    # --- masked path (causal mask, broadcast over batch & heads, f32) ---
    mask = jnp.tril(jnp.ones((Sq, Sk), dtype=jnp.int32))
    out_m = jax.block_until_ready(
        multi_head_attention_forward(Q, K, V, params, num_heads, mask=mask))
    ref_m = mha_reference(Q, K, V, params, num_heads, mask=mask)
    assert jnp.allclose(out_m, ref_m, atol=1e-4, rtol=1e-3), "mismatch vs reference (masked)"

    # --- optional bf16-MXU path (looser tolerance; softmax/accumulation stay f32) ---
    out_b = jax.block_until_ready(
        multi_head_attention_forward(Q, K, V, params, num_heads, mask=mask,
                                     use_bf16_matmul=True))
    assert jnp.allclose(out_b, ref_m, atol=1e-1, rtol=1e-1), "mismatch vs reference (bf16)"

    print("KERNEL_OK")
</pallas_src>

<mosaic_0001>
module attributes {stable_mosaic.version = 11 : i64} {
  func.func @kernel(%arg0: i32, %arg1: memref<1x8x32xf32, #tpu.memory_space<vmem>>, %arg2: memref<1x8x32xf32, #tpu.memory_space<vmem>>, %arg3: memref<1x8x32xf32, #tpu.memory_space<vmem>>, %arg4: memref<32x32xf32, #tpu.memory_space<vmem>>, %arg5: memref<1x32xf32, #tpu.memory_space<vmem>>, %arg6: memref<32x32xf32, #tpu.memory_space<vmem>>, %arg7: memref<1x32xf32, #tpu.memory_space<vmem>>, %arg8: memref<32x32xf32, #tpu.memory_space<vmem>>, %arg9: memref<1x32xf32, #tpu.memory_space<vmem>>, %arg10: memref<4x8x32xf32, #tpu.memory_space<vmem>>, %arg11: memref<1x32xf32, #tpu.memory_space<vmem>>, %arg12: memref<1x8x32xf32, #tpu.memory_space<vmem>>) attributes {dimension_semantics = [#tpu.dimension_semantics<parallel>], iteration_bounds = array<i64: 2>, scalar_prefetch = 0 : i64, scratch_operands = 0 : i64, tpu.core_type = #tpu.core_type<tc>, window_params = [{transform_indices = @transform_0, window_bounds = array<i64: 1, 8, 32>}, {transform_indices = @transform_1, window_bounds = array<i64: 1, 8, 32>}, {transform_indices = @transform_2, window_bounds = array<i64: 1, 8, 32>}, {pipeline_mode = #tpu.pipeline_mode<synchronous>, transform_indices = @transform_3, window_bounds = array<i64: 32, 32>}, {pipeline_mode = #tpu.pipeline_mode<synchronous>, transform_indices = @transform_4, window_bounds = array<i64: 1, 32>}, {pipeline_mode = #tpu.pipeline_mode<synchronous>, transform_indices = @transform_5, window_bounds = array<i64: 32, 32>}, {pipeline_mode = #tpu.pipeline_mode<synchronous>, transform_indices = @transform_6, window_bounds = array<i64: 1, 32>}, {pipeline_mode = #tpu.pipeline_mode<synchronous>, transform_indices = @transform_7, window_bounds = array<i64: 32, 32>}, {pipeline_mode = #tpu.pipeline_mode<synchronous>, transform_indices = @transform_8, window_bounds = array<i64: 1, 32>}, {pipeline_mode = #tpu.pipeline_mode<synchronous>, transform_indices = @transform_9, window_bounds = array<i64: 4, 8, 32>}, {pipeline_mode = #tpu.pipeline_mode<synchronous>, transform_indices = @transform_10, window_bounds = array<i64: 1, 32>}, {transform_indices = @transform_11, window_bounds = array<i64: 1, 8, 32>}]} {
    %c0 = arith.constant 0 : index
    %c0_0 = arith.constant 0 : index
    %c0_1 = arith.constant 0 : index
    %0 = vector.load %arg1[%c0, %c0_0, %c0_1] : memref<1x8x32xf32, #tpu.memory_space<vmem>>, vector<1x8x32xf32>
    %1 = vector.shape_cast %0 : vector<1x8x32xf32> to vector<8x32xf32>
    %c0_2 = arith.constant 0 : index
    %c0_3 = arith.constant 0 : index
    %c0_4 = arith.constant 0 : index
    %2 = vector.load %arg2[%c0_2, %c0_3, %c0_4] : memref<1x8x32xf32, #tpu.memory_space<vmem>>, vector<1x8x32xf32>
    %3 = vector.shape_cast %2 : vector<1x8x32xf32> to vector<8x32xf32>
    %c0_5 = arith.constant 0 : index
    %c0_6 = arith.constant 0 : index
    %c0_7 = arith.constant 0 : index
    %4 = vector.load %arg3[%c0_5, %c0_6, %c0_7] : memref<1x8x32xf32, #tpu.memory_space<vmem>>, vector<1x8x32xf32>
    %5 = vector.shape_cast %4 : vector<1x8x32xf32> to vector<8x32xf32>
    %c0_8 = arith.constant 0 : index
    %c0_9 = arith.constant 0 : index
    %6 = vector.load %arg4[%c0_8, %c0_9] : memref<32x32xf32, #tpu.memory_space<vmem>>, vector<32x32xf32>
    %cst = arith.constant dense<0.000000e+00> : vector<8x32xf32>
    %7 = tpu.matmul %1, %6, %cst {dimension_numbers = #tpu.dot_dimension_numbers<[1], [0], [0], [1], [0, 0, 1, 1], [], []>} : vector<8x32xf32>, vector<32x32xf32>, vector<8x32xf32> -> vector<8x32xf32>
    %c0_10 = arith.constant 0 : index
    %c0_11 = arith.constant 0 : index
    %8 = vector.load %arg5[%c0_10, %c0_11] : memref<1x32xf32, #tpu.memory_space<vmem>>, vector<1x32xf32>
    %9 = vector.broadcast %8 : vector<1x32xf32> to vector<8x32xf32>
    %10 = arith.addf %7, %9 : vector<8x32xf32>
    %cst_12 = arith.constant 0.353553385 : f32
    %11 = vector.broadcast %cst_12 : f32 to vector<8x32xf32>
    %12 = arith.mulf %10, %11 : vector<8x32xf32>
    %c0_13 = arith.constant 0 : index
    %c0_14 = arith.constant 0 : index
    %13 = vector.load %arg6[%c0_13, %c0_14] : memref<32x32xf32, #tpu.memory_space<vmem>>, vector<32x32xf32>
    %cst_15 = arith.constant dense<0.000000e+00> : vector<8x32xf32>
    %14 = tpu.matmul %3, %13, %cst_15 {dimension_numbers = #tpu.dot_dimension_numbers<[1], [0], [0], [1], [0, 0, 1, 1], [], []>} : vector<8x32xf32>, vector<32x32xf32>, vector<8x32xf32> -> vector<8x32xf32>
    %c0_16 = arith.constant 0 : index
    %c0_17 = arith.constant 0 : index
    %15 = vector.load %arg7[%c0_16, %c0_17] : memref<1x32xf32, #tpu.memory_space<vmem>>, vector<1x32xf32>
    %16 = vector.broadcast %15 : vector<1x32xf32> to vector<8x32xf32>
    %17 = arith.addf %14, %16 : vector<8x32xf32>
    %c0_18 = arith.constant 0 : index
    %c0_19 = arith.constant 0 : index
    %18 = vector.load %arg8[%c0_18, %c0_19] : memref<32x32xf32, #tpu.memory_space<vmem>>, vector<32x32xf32>
    %cst_20 = arith.constant dense<0.000000e+00> : vector<8x32xf32>
    %19 = tpu.matmul %5, %18, %cst_20 {dimension_numbers = #tpu.dot_dimension_numbers<[1], [0], [0], [1], [0, 0, 1, 1], [], []>} : vector<8x32xf32>, vector<32x32xf32>, vector<8x32xf32> -> vector<8x32xf32>
    %c0_21 = arith.constant 0 : index
    %c0_22 = arith.constant 0 : index
    %20 = vector.load %arg9[%c0_21, %c0_22] : memref<1x32xf32, #tpu.memory_space<vmem>>, vector<1x32xf32>
    %21 = vector.broadcast %20 : vector<1x32xf32> to vector<8x32xf32>
    %22 = arith.addf %19, %21 : vector<8x32xf32>
    %23 = vector.extract_strided_slice %12 {offsets = [0, 0], sizes = [8, 8], strides = [1, 1]} : vector<8x32xf32> to vector<8x8xf32>
    %24 = vector.extract_strided_slice %17 {offsets = [0, 0], sizes = [8, 8], strides = [1, 1]} : vector<8x32xf32> to vector<8x8xf32>
    %25 = vector.extract_strided_slice %22 {offsets = [0, 0], sizes = [8, 8], strides = [1, 1]} : vector<8x32xf32> to vector<8x8xf32>
    "tpu.trace_start"() <{level = 10 : i32, message = "qd,kd->qk"}> : () -> ()
    %cst_23 = arith.constant dense<0.000000e+00> : vector<8x8xf32>
    %26 = tpu.matmul %23, %24, %cst_23 {dimension_numbers = #tpu.dot_dimension_numbers<[1], [1], [0], [0], [0, 0, 1, 0], [], []>} : vector<8x8xf32>, vector<8x8xf32>, vector<8x8xf32> -> vector<8x8xf32>
    "tpu.trace_stop"() : () -> ()
    %cst_24 = arith.constant dense<0xFF800000> : vector<8xf32>
    %27 = vector.multi_reduction <maximumf>, %26, %cst_24 [1] : vector<8x8xf32> to vector<8xf32>
    %28 = vector.shape_cast %27 : vector<8xf32> to vector<8x1xf32>
    %29 = vector.broadcast %28 : vector<8x1xf32> to vector<8x8xf32>
    %30 = arith.subf %26, %29 : vector<8x8xf32>
    %31 = math.exp %30 : vector<8x8xf32>
    %cst_25 = arith.constant dense<0.000000e+00> : vector<8xf32>
    %32 = vector.multi_reduction <add>, %31, %cst_25 [1] : vector<8x8xf32> to vector<8xf32>
    %33 = vector.shape_cast %32 : vector<8xf32> to vector<8x1xf32>
    %cst_26 = arith.constant dense<0.000000e+00> : vector<8x8xf32>
    %34 = tpu.matmul %31, %25, %cst_26 {dimension_numbers = #tpu.dot_dimension_numbers<[1], [0], [0], [1], [0, 0, 1, 1], [], []>} : vector<8x8xf32>, vector<8x8xf32>, vector<8x8xf32> -> vector<8x8xf32>
    %35 = vector.broadcast %33 : vector<8x1xf32> to vector<8x8xf32>
    %36 = arith.divf %34, %35 : vector<8x8xf32>
    %c0_27 = arith.constant 0 : index
    %c0_28 = arith.constant 0 : index
    %c0_29 = arith.constant 0 : index
    %37 = vector.load %arg10[%c0_27, %c0_28, %c0_29] : memref<4x8x32xf32, #tpu.memory_space<vmem>>, vector<1x8x32xf32>
    %38 = vector.shape_cast %37 : vector<1x8x32xf32> to vector<8x32xf32>
    %cst_30 = arith.constant dense<0.000000e+00> : vector<8x32xf32>
    %39 = tpu.matmul %36, %38, %cst_30 {dimension_numbers = #tpu.dot_dimension_numbers<[1], [0], [0], [1], [0, 0, 1, 1], [], []>} : vector<8x8xf32>, vector<8x32xf32>, vector<8x32xf32> -> vector<8x32xf32>
    %40 = vector.extract_strided_slice %12 {offsets = [0, 8], sizes = [8, 8], strides = [1, 1]} : vector<8x32xf32> to vector<8x8xf32>
    %41 = vector.extract_strided_slice %17 {offsets = [0, 8], sizes = [8, 8], strides = [1, 1]} : vector<8x32xf32> to vector<8x8xf32>
    %42 = vector.extract_strided_slice %22 {offsets = [0, 8], sizes = [8, 8], strides = [1, 1]} : vector<8x32xf32> to vector<8x8xf32>
    "tpu.trace_start"() <{level = 10 : i32, message = "qd,kd->qk"}> : () -> ()
    %cst_31 = arith.constant dense<0.000000e+00> : vector<8x8xf32>
    %43 = tpu.matmul %40, %41, %cst_31 {dimension_numbers = #tpu.dot_dimension_numbers<[1], [1], [0], [0], [0, 0, 1, 0], [], []>} : vector<8x8xf32>, vector<8x8xf32>, vector<8x8xf32> -> vector<8x8xf32>
    "tpu.trace_stop"() : () -> ()
    %cst_32 = arith.constant dense<0xFF800000> : vector<8xf32>
    %44 = vector.multi_reduction <maximumf>, %43, %cst_32 [1] : vector<8x8xf32> to vector<8xf32>
    %45 = vector.shape_cast %44 : vector<8xf32> to vector<8x1xf32>
    %46 = vector.broadcast %45 : vector<8x1xf32> to vector<8x8xf32>
    %47 = arith.subf %43, %46 : vector<8x8xf32>
    %48 = math.exp %47 : vector<8x8xf32>
    %cst_33 = arith.constant dense<0.000000e+00> : vector<8xf32>
    %49 = vector.multi_reduction <add>, %48, %cst_33 [1] : vector<8x8xf32> to vector<8xf32>
    %50 = vector.shape_cast %49 : vector<8xf32> to vector<8x1xf32>
    %cst_34 = arith.constant dense<0.000000e+00> : vector<8x8xf32>
    %51 = tpu.matmul %48, %42, %cst_34 {dimension_numbers = #tpu.dot_dimension_numbers<[1], [0], [0], [1], [0, 0, 1, 1], [], []>} : vector<8x8xf32>, vector<8x8xf32>, vector<8x8xf32> -> vector<8x8xf32>
    %52 = vector.broadcast %50 : vector<8x1xf32> to vector<8x8xf32>
    %53 = arith.divf %51, %52 : vector<8x8xf32>
    %c1 = arith.constant 1 : index
    %c0_35 = arith.constant 0 : index
    %c0_36 = arith.constant 0 : index
    %54 = vector.load %arg10[%c1, %c0_35, %c0_36] : memref<4x8x32xf32, #tpu.memory_space<vmem>>, vector<1x8x32xf32>
    %55 = vector.shape_cast %54 : vector<1x8x32xf32> to vector<8x32xf32>
    %cst_37 = arith.constant dense<0.000000e+00> : vector<8x32xf32>
    %56 = tpu.matmul %53, %55, %cst_37 {dimension_numbers = #tpu.dot_dimension_numbers<[1], [0], [0], [1], [0, 0, 1, 1], [], []>} : vector<8x8xf32>, vector<8x32xf32>, vector<8x32xf32> -> vector<8x32xf32>
    %57 = arith.addf %39, %56 : vector<8x32xf32>
    %58 = vector.extract_strided_slice %12 {offsets = [0, 16], sizes = [8, 8], strides = [1, 1]} : vector<8x32xf32> to vector<8x8xf32>
    %59 = vector.extract_strided_slice %17 {offsets = [0, 16], sizes = [8, 8], strides = [1, 1]} : vector<8x32xf32> to vector<8x8xf32>
    %60 = vector.extract_strided_slice %22 {offsets = [0, 16], sizes = [8, 8], strides = [1, 1]} : vector<8x32xf32> to vector<8x8xf32>
    "tpu.trace_start"() <{level = 10 : i32, message = "qd,kd->qk"}> : () -> ()
    %cst_38 = arith.constant dense<0.000000e+00> : vector<8x8xf32>
    %61 = tpu.matmul %58, %59, %cst_38 {dimension_numbers = #tpu.dot_dimension_numbers<[1], [1], [0], [0], [0, 0, 1, 0], [], []>} : vector<8x8xf32>, vector<8x8xf32>, vector<8x8xf32> -> vector<8x8xf32>
    "tpu.trace_stop"() : () -> ()
    %cst_39 = arith.constant dense<0xFF800000> : vector<8xf32>
    %62 = vector.multi_reduction <maximumf>, %61, %cst_39 [1] : vector<8x8xf32> to vector<8xf32>
    %63 = vector.shape_cast %62 : vector<8xf32> to vector<8x1xf32>
    %64 = vector.broadcast %63 : vector<8x1xf32> to vector<8x8xf32>
    %65 = arith.subf %61, %64 : vector<8x8xf32>
    %66 = math.exp %65 : vector<8x8xf32>
    %cst_40 = arith.constant dense<0.000000e+00> : vector<8xf32>
    %67 = vector.multi_reduction <add>, %66, %cst_40 [1] : vector<8x8xf32> to vector<8xf32>
    %68 = vector.shape_cast %67 : vector<8xf32> to vector<8x1xf32>
    %cst_41 = arith.constant dense<0.000000e+00> : vector<8x8xf32>
    %69 = tpu.matmul %66, %60, %cst_41 {dimension_numbers = #tpu.dot_dimension_numbers<[1], [0], [0], [1], [0, 0, 1, 1], [], []>} : vector<8x8xf32>, vector<8x8xf32>, vector<8x8xf32> -> vector<8x8xf32>
    %70 = vector.broadcast %68 : vector<8x1xf32> to vector<8x8xf32>
    %71 = arith.divf %69, %70 : vector<8x8xf32>
    %c2 = arith.constant 2 : index
    %c0_42 = arith.constant 0 : index
    %c0_43 = arith.constant 0 : index
    %72 = vector.load %arg10[%c2, %c0_42, %c0_43] : memref<4x8x32xf32, #tpu.memory_space<vmem>>, vector<1x8x32xf32>
    %73 = vector.shape_cast %72 : vector<1x8x32xf32> to vector<8x32xf32>
    %cst_44 = arith.constant dense<0.000000e+00> : vector<8x32xf32>
    %74 = tpu.matmul %71, %73, %cst_44 {dimension_numbers = #tpu.dot_dimension_numbers<[1], [0], [0], [1], [0, 0, 1, 1], [], []>} : vector<8x8xf32>, vector<8x32xf32>, vector<8x32xf32> -> vector<8x32xf32>
    %75 = arith.addf %57, %74 : vector<8x32xf32>
    %76 = vector.extract_strided_slice %12 {offsets = [0, 24], sizes = [8, 8], strides = [1, 1]} : vector<8x32xf32> to vector<8x8xf32>
    %77 = vector.extract_strided_slice %17 {offsets = [0, 24], sizes = [8, 8], strides = [1, 1]} : vector<8x32xf32> to vector<8x8xf32>
    %78 = vector.extract_strided_slice %22 {offsets = [0, 24], sizes = [8, 8], strides = [1, 1]} : vector<8x32xf32> to vector<8x8xf32>
    "tpu.trace_start"() <{level = 10 : i32, message = "qd,kd->qk"}> : () -> ()
    %cst_45 = arith.constant dense<0.000000e+00> : vector<8x8xf32>
    %79 = tpu.matmul %76, %77, %cst_45 {dimension_numbers = #tpu.dot_dimension_numbers<[1], [1], [0], [0], [0, 0, 1, 0], [], []>} : vector<8x8xf32>, vector<8x8xf32>, vector<8x8xf32> -> vector<8x8xf32>
    "tpu.trace_stop"() : () -> ()
    %cst_46 = arith.constant dense<0xFF800000> : vector<8xf32>
    %80 = vector.multi_reduction <maximumf>, %79, %cst_46 [1] : vector<8x8xf32> to vector<8xf32>
    %81 = vector.shape_cast %80 : vector<8xf32> to vector<8x1xf32>
    %82 = vector.broadcast %81 : vector<8x1xf32> to vector<8x8xf32>
    %83 = arith.subf %79, %82 : vector<8x8xf32>
    %84 = math.exp %83 : vector<8x8xf32>
    %cst_47 = arith.constant dense<0.000000e+00> : vector<8xf32>
    %85 = vector.multi_reduction <add>, %84, %cst_47 [1] : vector<8x8xf32> to vector<8xf32>
    %86 = vector.shape_cast %85 : vector<8xf32> to vector<8x1xf32>
    %cst_48 = arith.constant dense<0.000000e+00> : vector<8x8xf32>
    %87 = tpu.matmul %84, %78, %cst_48 {dimension_numbers = #tpu.dot_dimension_numbers<[1], [0], [0], [1], [0, 0, 1, 1], [], []>} : vector<8x8xf32>, vector<8x8xf32>, vector<8x8xf32> -> vector<8x8xf32>
    %88 = vector.broadcast %86 : vector<8x1xf32> to vector<8x8xf32>
    %89 = arith.divf %87, %88 : vector<8x8xf32>
    %c3 = arith.constant 3 : index
    %c0_49 = arith.constant 0 : index
    %c0_50 = arith.constant 0 : index
    %90 = vector.load %arg10[%c3, %c0_49, %c0_50] : memref<4x8x32xf32, #tpu.memory_space<vmem>>, vector<1x8x32xf32>
    %91 = vector.shape_cast %90 : vector<1x8x32xf32> to vector<8x32xf32>
    %cst_51 = arith.constant dense<0.000000e+00> : vector<8x32xf32>
    %92 = tpu.matmul %89, %91, %cst_51 {dimension_numbers = #tpu.dot_dimension_numbers<[1], [0], [0], [1], [0, 0, 1, 1], [], []>} : vector<8x8xf32>, vector<8x32xf32>, vector<8x32xf32> -> vector<8x32xf32>
    %93 = arith.addf %75, %92 : vector<8x32xf32>
    %c0_52 = arith.constant 0 : index
    %c0_53 = arith.constant 0 : index
    %94 = vector.load %arg11[%c0_52, %c0_53] : memref<1x32xf32, #tpu.memory_space<vmem>>, vector<1x32xf32>
    %95 = vector.broadcast %94 : vector<1x32xf32> to vector<8x32xf32>
    %96 = arith.addf %93, %95 : vector<8x32xf32>
    %c0_54 = arith.constant 0 : index
    %c0_55 = arith.constant 0 : index
    %c0_56 = arith.constant 0 : index
    %97 = vector.load %arg12[%c0_54, %c0_55, %c0_56] : memref<1x8x32xf32, #tpu.memory_space<vmem>>, vector<1x8x32xf32>
    %98 = vector.shape_cast %97 : vector<1x8x32xf32> to vector<8x32xf32>
    %99 = vector.shape_cast %96 : vector<8x32xf32> to vector<1x8x32xf32>
    tpu.vector_store %arg12[%c0_54, %c0_55, %c0_56], %99 {strides = array<i32>} : memref<1x8x32xf32, #tpu.memory_space<vmem>>, vector<1x8x32xf32>,
    return
  }
  func.func @transform_0(%arg0: i32) -> (i32, i32, i32) {
    %c0_i32 = arith.constant 0 : i32
    %c0_i32_0 = arith.constant 0 : i32
    %c0_i32_1 = arith.constant 0 : i32
    return %arg0, %c0_i32, %c0_i32_0 : i32, i32, i32
  }
  func.func @transform_1(%arg0: i32) -> (i32, i32, i32) {
    %c0_i32 = arith.constant 0 : i32
    %c0_i32_0 = arith.constant 0 : i32
    %c0_i32_1 = arith.constant 0 : i32
    return %arg0, %c0_i32, %c0_i32_0 : i32, i32, i32
  }
  func.func @transform_2(%arg0: i32) -> (i32, i32, i32) {
    %c0_i32 = arith.constant 0 : i32
    %c0_i32_0 = arith.constant 0 : i32
    %c0_i32_1 = arith.constant 0 : i32
    return %arg0, %c0_i32, %c0_i32_0 : i32, i32, i32
  }
  func.func @transform_3(%arg0: i32) -> (i32, i32) {
    %c0_i32 = arith.constant 0 : i32
    %c0_i32_0 = arith.constant 0 : i32
    %c0_i32_1 = arith.constant 0 : i32
    return %c0_i32, %c0_i32_0 : i32, i32
  }
  func.func @transform_4(%arg0: i32) -> (i32, i32) {
    %c0_i32 = arith.constant 0 : i32
    %c0_i32_0 = arith.constant 0 : i32
    %c0_i32_1 = arith.constant 0 : i32
    return %c0_i32, %c0_i32_0 : i32, i32
  }
  func.func @transform_5(%arg0: i32) -> (i32, i32) {
    %c0_i32 = arith.constant 0 : i32
    %c0_i32_0 = arith.constant 0 : i32
    %c0_i32_1 = arith.constant 0 : i32
    return %c0_i32, %c0_i32_0 : i32, i32
  }
  func.func @transform_6(%arg0: i32) -> (i32, i32) {
    %c0_i32 = arith.constant 0 : i32
    %c0_i32_0 = arith.constant 0 : i32
    %c0_i32_1 = arith.constant 0 : i32
    return %c0_i32, %c0_i32_0 : i32, i32
  }
  func.func @transform_7(%arg0: i32) -> (i32, i32) {
    %c0_i32 = arith.constant 0 : i32
    %c0_i32_0 = arith.constant 0 : i32
    %c0_i32_1 = arith.constant 0 : i32
    return %c0_i32, %c0_i32_0 : i32, i32
  }
  func.func @transform_8(%arg0: i32) -> (i32, i32) {
    %c0_i32 = arith.constant 0 : i32
    %c0_i32_0 = arith.constant 0 : i32
    %c0_i32_1 = arith.constant 0 : i32
    return %c0_i32, %c0_i32_0 : i32, i32
  }
  func.func @transform_9(%arg0: i32) -> (i32, i32, i32) {
    %c0_i32 = arith.constant 0 : i32
    %c0_i32_0 = arith.constant 0 : i32
    %c0_i32_1 = arith.constant 0 : i32
    %c0_i32_2 = arith.constant 0 : i32
    return %c0_i32, %c0_i32_0, %c0_i32_1 : i32, i32, i32
  }
  func.func @transform_10(%arg0: i32) -> (i32, i32) {
    %c0_i32 = arith.constant 0 : i32
    %c0_i32_0 = arith.constant 0 : i32
    %c0_i32_1 = arith.constant 0 : i32
    return %c0_i32, %c0_i32_0 : i32, i32
  }
  func.func @transform_11(%arg0: i32) -> (i32, i32, i32) {
    %c0_i32 = arith.constant 0 : i32
    %c0_i32_0 = arith.constant 0 : i32
    %c0_i32_1 = arith.constant 0 : i32
    return %arg0, %c0_i32, %c0_i32_0 : i32, i32, i32
  }
}

</mosaic_0001>

<llo_original>
// kernel: tpu_custom_call.1
$region0: #{tpu_custom_call.1}
  #allocation0 [shape = 'u32[]', space=smem, size = 0x4, offset = 0x4, fixed_abs, tag = 'smem constant byte address 0x4 - core index']
  #allocation1 [shape = 'u32[144,128]{1,0:T(1,128)}', space=vmem, size = 0x12000, scoped, tag = 'internal scratch']
  %s0 = inlined_call_operand.hbm [shape: f32[2,8,32], index: 0, kind: input, shape index: {}]
  %s1 = inlined_call_operand.hbm [shape: f32[2,8,32], index: 1, kind: input, shape index: {}]
  %s2 = inlined_call_operand.hbm [shape: f32[2,8,32], index: 2, kind: input, shape index: {}]
  %s3 = inlined_call_operand.hbm [shape: f32[32,32], index: 3, kind: input, shape index: {}]
  %s4 = inlined_call_operand.vmem [shape: f32[1,32], index: 4, kind: input, shape index: {}]
  %s5 = inlined_call_operand.hbm [shape: f32[32,32], index: 5, kind: input, shape index: {}]
  %s6 = inlined_call_operand.vmem [shape: f32[1,32], index: 6, kind: input, shape index: {}]
  %s7 = inlined_call_operand.hbm [shape: f32[32,32], index: 7, kind: input, shape index: {}]
  %s8 = inlined_call_operand.hbm [shape: f32[1,32], index: 8, kind: input, shape index: {}]
  %s9 = inlined_call_operand.vmem [shape: f32[4,8,32], index: 9, kind: input, shape index: {}]
  %s10 = inlined_call_operand.vmem [shape: f32[1,32], index: 10, kind: input, shape index: {}]
  %s11 = inlined_call_operand.hbm [shape: f32[2,8,32], index: 11, kind: output, shape index: {}]
  %s12 = sld [smem:[#allocation0]]
  $region105: #{tpu_custom_call.1} parent=0
    _
  %s14 = ssub.s32 1, %s12
  %s15 = scalar_select 0, %s14, %s12
  $region1: #{tpu_custom_call.1} parent=0
    #allocation2 [shape = 'u8[8192]{0}', space=vmem, size = 0x2000, scoped, tag = 'input window, operand 0']
    #allocation3 [shape = 's32[2]{0}', space=sflag, size = 0x8, scoped, tag = 'scoped memory for tpu_custom_call.1']
    #allocation4 [shape = 's32[2]{0}', space=sflag, size = 0x8, scoped, tag = 'scoped memory for tpu_custom_call.1']
    #allocation5 [shape = 'u8[8192]{0}', space=vmem, size = 0x2000, scoped, tag = 'input window, operand 1']
    #allocation6 [shape = 's32[2]{0}', space=sflag, size = 0x8, scoped, tag = 'scoped memory for tpu_custom_call.1']
    #allocation7 [shape = 'u8[8192]{0}', space=vmem, size = 0x2000, scoped, tag = 'input window, operand 2']
    #allocation8 [shape = 'u8[16384]{0}', space=vmem, size = 0x4000, scoped, tag = 'input window, operand 3, single buffered']
    #allocation9 [shape = 's32[1]{0}', space=sflag, size = 0x4, scoped, tag = 'scoped memory for tpu_custom_call.1']
    #allocation10 [shape = 'u8[16384]{0}', space=vmem, size = 0x4000, scoped, tag = 'input window, operand 5, single buffered']
    #allocation11 [shape = 'u8[16384]{0}', space=vmem, size = 0x4000, scoped, tag = 'input window, operand 7, single buffered']
    #allocation12 [shape = 's32[1]{0}', space=sflag, size = 0x4, scoped, tag = 'scoped memory for tpu_custom_call.1']
    #allocation13 [shape = 'u8[512]{0}', space=vmem, size = 0x400, scoped, tag = 'input window, operand 8, single buffered']
    #allocation14 [shape = 'u8[8192]{0}', space=vmem, size = 0x2000, scoped, tag = 'output window, operand 0']
    %16 = vsyncpa [#allocation3], 0
    %s17 = scalar_lea.sflag [#allocation3], 1
    %18 = vsyncpa %s17, 0
    %19 = vsyncpa [#allocation6], 0
    %s20 = scalar_lea.sflag [#allocation6], 1
    %21 = vsyncpa %s20, 0
    %22 = vsyncpa [#allocation9], 0
    %23 = vsyncpa [#allocation12], 0
    %24 = vsyncpa [#allocation4], 0
    %s25 = scalar_lea.sflag [#allocation4], 1
    %26 = vsyncpa %s25, 0
    loop: start=0, step=1, limit=4
    $region2: #{tpu_custom_call.1} parent=1 // loop_pre_header
      _
    $region3: #{tpu_custom_call.1} parent=1 // loop_header
      %s28 = sphi 0, %s32
      %p29 = scmp.ge.s32.totalorder %s28, 4
      %s38 = sphi 0, %s40
      %s41 = sphi 0, %s38
      %s42 = sphi 0, %s41
      %s58 = sphi 0, %s42
      %s64 = sphi 0, %s66
      %s67 = sphi 0, %s64
      %s68 = sphi 0, %s67
      %s84 = sphi 0, %s68
      %s90 = sphi 0, %s92
      %s93 = sphi 0, %s90
      %s94 = sphi 0, %s93
      %s110 = sphi 0, %s94
      %s114 = sphi 0, %s114
      %s116 = sphi 0, %s114
      %s117 = sphi 0, %s116
      %s131 = sphi 0, %s117
      %s135 = sphi 0, %s135
      %s137 = sphi 0, %s135
      %s138 = sphi 0, %s137
      %s152 = sphi 0, %s138
      %s156 = sphi 0, %s156
      %s158 = sphi 0, %s156
      %s159 = sphi 0, %s158
      %s173 = sphi 0, %s159
      %s177 = sphi 0, %s177
      %s179 = sphi 0, %s177
      %s180 = sphi 0, %s179
      %s194 = sphi 0, %s180
      %s198 = sphi 0, %s198
      %s200 = sphi 0, %s198
      %s201 = sphi 0, %s200
      %s215 = sphi 0, %s201
      %s219 = sphi 0, %s219
      %s221 = sphi 0, %s219
      %s222 = sphi 0, %s221
      %s236 = sphi 0, %s222
      %s240 = sphi 0, %s240
      %s242 = sphi 0, %s240
      %s243 = sphi 0, %s242
      %s257 = sphi 0, %s243
      %s261 = sphi 0, %s261
      %s263 = sphi 0, %s261
      %s264 = sphi 0, %s263
      %s278 = sphi 0, %s264
      %s284 = sphi 0, %s286
      %s287 = sphi 0, %s284
      %s288 = sphi 0, %s287
      %s304 = sphi 0, %s288
    $region4: #{tpu_custom_call.1} parent=1 // loop_header_branch
      %31 = sbr.rel (%p29) target = $region8
    $region5: #{tpu_custom_call.1} parent=1 // loop_body
      %s33 = ssub.s32 %s28, 1
      %s34 = ssub.s32 %s28, 2
      %s35 = sadd.s32 %s28, 1
      %s36 = ssub.s32 %s28, %s35
      %p37 = scmp.eq.s32.totalorder %s36, 0
      %s39 = sadd.s32 %s38, 1
      %s40 = scalar_select %p37, %s38, %s39
      %p43 = pneg %p37
      %p44 = scmp.eq.s32.totalorder %s28, 1
      %p45 = por %p43, %p44
      %p46 = scmp.ne.s32.totalorder %s38, %s41
      %p47 = scmp.eq.s32.totalorder %s28, 0
      %p48 = por %p46, %p47
      %p49 = scmp.ne.s32.totalorder %s38, %s41
      %p50 = scmp.eq.s32.totalorder %s33, 1
      %p51 = por %p49, %p50
      %p52 = scmp.ne.s32.totalorder %s41, %s42
      %p53 = scmp.eq.s32.totalorder %s33, 0
      %p54 = por %p52, %p53
      %p55 = scmp.ne.s32.totalorder %s41, %s42
      %p56 = scmp.eq.s32.totalorder %s34, 1
      %p57 = por %p55, %p56
      %p59 = scmp.ne.s32.totalorder %s42, %s58
      %p60 = scmp.eq.s32.totalorder %s34, 0
      %p61 = por %p59, %p60
      %s62 = ssub.s32 %s28, %s35
      %p63 = scmp.eq.s32.totalorder %s62, 0
      %s65 = sadd.s32 %s64, 1
      %s66 = scalar_select %p63, %s64, %s65
      %p69 = pneg %p63
      %p70 = scmp.eq.s32.totalorder %s28, 1
      %p71 = por %p69, %p70
      %p72 = scmp.ne.s32.totalorder %s64, %s67
      %p73 = scmp.eq.s32.totalorder %s28, 0
      %p74 = por %p72, %p73
      %p75 = scmp.ne.s32.totalorder %s64, %s67
      %p76 = scmp.eq.s32.totalorder %s33, 1
      %p77 = por %p75, %p76
      %p78 = scmp.ne.s32.totalorder %s67, %s68
      %p79 = scmp.eq.s32.totalorder %s33, 0
      %p80 = por %p78, %p79
      %p81 = scmp.ne.s32.totalorder %s67, %s68
      %p82 = scmp.eq.s32.totalorder %s34, 1
      %p83 = por %p81, %p82
      %p85 = scmp.ne.s32.totalorder %s68, %s84
      %p86 = scmp.eq.s32.totalorder %s34, 0
      %p87 = por %p85, %p86
      %s88 = ssub.s32 %s28, %s35
      %p89 = scmp.eq.s32.totalorder %s88, 0
      %s91 = sadd.s32 %s90, 1
      %s92 = scalar_select %p89, %s90, %s91
      %p95 = pneg %p89
      %p96 = scmp.eq.s32.totalorder %s28, 1
      %p97 = por %p95, %p96
      %p98 = scmp.ne.s32.totalorder %s90, %s93
      %p99 = scmp.eq.s32.totalorder %s28, 0
      %p100 = por %p98, %p99
      %p101 = scmp.ne.s32.totalorder %s90, %s93
      %p102 = scmp.eq.s32.totalorder %s33, 1
      %p103 = por %p101, %p102
      %p104 = scmp.ne.s32.totalorder %s93, %s94
      %p105 = scmp.eq.s32.totalorder %s33, 0
      %p106 = por %p104, %p105
      %p107 = scmp.ne.s32.totalorder %s93, %s94
      %p108 = scmp.eq.s32.totalorder %s34, 1
      %p109 = por %p107, %p108
      %p111 = scmp.ne.s32.totalorder %s94, %s110
      %p112 = scmp.eq.s32.totalorder %s34, 0
      %p113 = por %p111, %p112
      %s115 = sadd.s32 %s114, 1
      %p118 = scmp.eq.s32.totalorder %s28, 1
      %p119 = scmp.ne.s32.totalorder %s114, %s116
      %p120 = scmp.eq.s32.totalorder %s28, 0
      %p121 = por %p119, %p120
      %p122 = scmp.ne.s32.totalorder %s114, %s116
      %p123 = scmp.eq.s32.totalorder %s33, 1
      %p124 = por %p122, %p123
      %p125 = scmp.ne.s32.totalorder %s116, %s117
      %p126 = scmp.eq.s32.totalorder %s33, 0
      %p127 = por %p125, %p126
      %p128 = scmp.ne.s32.totalorder %s116, %s117
      %p129 = scmp.eq.s32.totalorder %s34, 1
      %p130 = por %p128, %p129
      %p132 = scmp.ne.s32.totalorder %s117, %s131
      %p133 = scmp.eq.s32.totalorder %s34, 0
      %p134 = por %p132, %p133
      %s136 = sadd.s32 %s135, 1
      %p139 = scmp.eq.s32.totalorder %s28, 1
      %p140 = scmp.ne.s32.totalorder %s135, %s137
      %p141 = scmp.eq.s32.totalorder %s28, 0
      %p142 = por %p140, %p141
      %p143 = scmp.ne.s32.totalorder %s135, %s137
      %p144 = scmp.eq.s32.totalorder %s33, 1
      %p145 = por %p143, %p144
      %p146 = scmp.ne.s32.totalorder %s137, %s138
      %p147 = scmp.eq.s32.totalorder %s33, 0
      %p148 = por %p146, %p147
      %p149 = scmp.ne.s32.totalorder %s137, %s138
      %p150 = scmp.eq.s32.totalorder %s34, 1
      %p151 = por %p149, %p150
      %p153 = scmp.ne.s32.totalorder %s138, %s152
      %p154 = scmp.eq.s32.totalorder %s34, 0
      %p155 = por %p153, %p154
      %s157 = sadd.s32 %s156, 1
      %p160 = scmp.eq.s32.totalorder %s28, 1
      %p161 = scmp.ne.s32.totalorder %s156, %s158
      %p162 = scmp.eq.s32.totalorder %s28, 0
      %p163 = por %p161, %p162
      %p164 = scmp.ne.s32.totalorder %s156, %s158
      %p165 = scmp.eq.s32.totalorder %s33, 1
      %p166 = por %p164, %p165
      %p167 = scmp.ne.s32.totalorder %s158, %s159
      %p168 = scmp.eq.s32.totalorder %s33, 0
      %p169 = por %p167, %p168
      %p170 = scmp.ne.s32.totalorder %s158, %s159
      %p171 = scmp.eq.s32.totalorder %s34, 1
      %p172 = por %p170, %p171
      %p174 = scmp.ne.s32.totalorder %s159, %s173
      %p175 = scmp.eq.s32.totalorder %s34, 0
      %p176 = por %p174, %p175
      %s178 = sadd.s32 %s177, 1
      %p181 = scmp.eq.s32.totalorder %s28, 1
      %p182 = scmp.ne.s32.totalorder %s177, %s179
      %p183 = scmp.eq.s32.totalorder %s28, 0
      %p184 = por %p182, %p183
      %p185 = scmp.ne.s32.totalorder %s177, %s179
      %p186 = scmp.eq.s32.totalorder %s33, 1
      %p187 = por %p185, %p186
      %p188 = scmp.ne.s32.totalorder %s179, %s180
      %p189 = scmp.eq.s32.totalorder %s33, 0
      %p190 = por %p188, %p189
      %p191 = scmp.ne.s32.totalorder %s179, %s180
      %p192 = scmp.eq.s32.totalorder %s34, 1
      %p193 = por %p191, %p192
      %p195 = scmp.ne.s32.totalorder %s180, %s194
      %p196 = scmp.eq.s32.totalorder %s34, 0
      %p197 = por %p195, %p196
      %s199 = sadd.s32 %s198, 1
      %p202 = scmp.eq.s32.totalorder %s28, 1
      %p203 = scmp.ne.s32.totalorder %s198, %s200
      %p204 = scmp.eq.s32.totalorder %s28, 0
      %p205 = por %p203, %p204
      %p206 = scmp.ne.s32.totalorder %s198, %s200
      %p207 = scmp.eq.s32.totalorder %s33, 1
      %p208 = por %p206, %p207
      %p209 = scmp.ne.s32.totalorder %s200, %s201
      %p210 = scmp.eq.s32.totalorder %s33, 0
      %p211 = por %p209, %p210
      %p212 = scmp.ne.s32.totalorder %s200, %s201
      %p213 = scmp.eq.s32.totalorder %s34, 1
      %p214 = por %p212, %p213
      %p216 = scmp.ne.s32.totalorder %s201, %s215
      %p217 = scmp.eq.s32.totalorder %s34, 0
      %p218 = por %p216, %p217
      %s220 = sadd.s32 %s219, 1
      %p223 = scmp.eq.s32.totalorder %s28, 1
      %p224 = scmp.ne.s32.totalorder %s219, %s221
      %p225 = scmp.eq.s32.totalorder %s28, 0
      %p226 = por %p224, %p225
      %p227 = scmp.ne.s32.totalorder %s219, %s221
      %p228 = scmp.eq.s32.totalorder %s33, 1
      %p229 = por %p227, %p228
      %p230 = scmp.ne.s32.totalorder %s221, %s222
      %p231 = scmp.eq.s32.totalorder %s33, 0
      %p232 = por %p230, %p231
      %p233 = scmp.ne.s32.totalorder %s221, %s222
      %p234 = scmp.eq.s32.totalorder %s34, 1
      %p235 = por %p233, %p234
      %p237 = scmp.ne.s32.totalorder %s222, %s236
      %p238 = scmp.eq.s32.totalorder %s34, 0
      %p239 = por %p237, %p238
      %s241 = sadd.s32 %s240, 1
      %p244 = scmp.eq.s32.totalorder %s28, 1
      %p245 = scmp.ne.s32.totalorder %s240, %s242
      %p246 = scmp.eq.s32.totalorder %s28, 0
      %p247 = por %p245, %p246
      %p248 = scmp.ne.s32.totalorder %s240, %s242
      %p249 = scmp.eq.s32.totalorder %s33, 1
      %p250 = por %p248, %p249
      %p251 = scmp.ne.s32.totalorder %s242, %s243
      %p252 = scmp.eq.s32.totalorder %s33, 0
      %p253 = por %p251, %p252
      %p254 = scmp.ne.s32.totalorder %s242, %s243
      %p255 = scmp.eq.s32.totalorder %s34, 1
      %p256 = por %p254, %p255
      %p258 = scmp.ne.s32.totalorder %s243, %s257
      %p259 = scmp.eq.s32.totalorder %s34, 0
      %p260 = por %p258, %p259
      %s262 = sadd.s32 %s261, 1
      %p265 = scmp.eq.s32.totalorder %s28, 1
      %p266 = scmp.ne.s32.totalorder %s261, %s263
      %p267 = scmp.eq.s32.totalorder %s28, 0
      %p268 = por %p266, %p267
      %p269 = scmp.ne.s32.totalorder %s261, %s263
      %p270 = scmp.eq.s32.totalorder %s33, 1
      %p271 = por %p269, %p270
      %p272 = scmp.ne.s32.totalorder %s263, %s264
      %p273 = scmp.eq.s32.totalorder %s33, 0
      %p274 = por %p272, %p273
      %p275 = scmp.ne.s32.totalorder %s263, %s264
      %p276 = scmp.eq.s32.totalorder %s34, 1
      %p277 = por %p275, %p276
      %p279 = scmp.ne.s32.totalorder %s264, %s278
      %p280 = scmp.eq.s32.totalorder %s34, 0
      %p281 = por %p279, %p280
      %s282 = ssub.s32 %s28, %s35
      %p283 = scmp.eq.s32.totalorder %s282, 0
      %s285 = sadd.s32 %s284, 1
      %s286 = scalar_select %p283, %s284, %s285
      %p289 = pneg %p283
      %p290 = scmp.eq.s32.totalorder %s28, 1
      %p291 = por %p289, %p290
      %p292 = scmp.ne.s32.totalorder %s284, %s287
      %p293 = scmp.eq.s32.totalorder %s28, 0
      %p294 = por %p292, %p293
      %p295 = scmp.ne.s32.totalorder %s284, %s287
      %p296 = scmp.eq.s32.totalorder %s33, 1
      %p297 = por %p295, %p296
      %p298 = scmp.ne.s32.totalorder %s287, %s288
      %p299 = scmp.eq.s32.totalorder %s33, 0
      %p300 = por %p298, %p299
      %p301 = scmp.ne.s32.totalorder %s287, %s288
      %p302 = scmp.eq.s32.totalorder %s34, 1
      %p303 = por %p301, %p302
      %p305 = scmp.ne.s32.totalorder %s288, %s304
      %p306 = scmp.eq.s32.totalorder %s34, 0
      %p307 = por %p305, %p306
      %p308 = scmp.le.s32.totalorder 1, %s28
      %p309 = scmp.lt.s32.totalorder %s28, 3
      %p310 = pnand %p308, %p309
      %p311 = pneg %p310
      // Predicated region
      $region9: #{tpu_custom_call.1} parent=5 // pred_check
        _
      $region10: #{tpu_custom_call.1} parent=5 // pred_check_branch
        %313 = sbr.rel (%p310) target = $region12
      $region11: #{tpu_custom_call.1} parent=5 // pred_region
        %s314 = ssub.s32 %s28, 1
        // Predicated region
        $region13: #{tpu_custom_call.1} parent=11 // pred_check
          %p315 = pneg %p127
        $region14: #{tpu_custom_call.1} parent=11 // pred_check_branch
          %317 = sbr.rel (%p315) target = $region16
        $region15: #{tpu_custom_call.1} parent=11 // pred_region
          %s319 = ssub.s32 512, 512
          %320 = vsyncadd [#allocation9], %s319
          %s321 = sshll.u32 [#allocation8], 4
          %s322 = int_to_ptr.vmem [resolvable:$true] %s321
          %327 = dma.hbm_to_vmem [thread:$0]  %s3, 512, %s322, [#allocation9], 128, 128, 8
        $region16: #{tpu_custom_call.1} parent=11 // pred_fallthru
          _
        // Predicated region
        $region17: #{tpu_custom_call.1} parent=11 // pred_check
          %p328 = pneg %p148
        $region18: #{tpu_custom_call.1} parent=11 // pred_check_branch
          %330 = sbr.rel (%p328) target = $region20
        $region19: #{tpu_custom_call.1} parent=11 // pred_region
          _
        $region20: #{tpu_custom_call.1} parent=11 // pred_fallthru
          _
        // Predicated region
        $region21: #{tpu_custom_call.1} parent=11 // pred_check
          %p331 = pneg %p169
        $region22: #{tpu_custom_call.1} parent=11 // pred_check_branch
          %333 = sbr.rel (%p331) target = $region24
        $region23: #{tpu_custom_call.1} parent=11 // pred_region
          %s335 = ssub.s32 512, 512
          %336 = vsyncadd [#allocation9], %s335
          %s337 = sshll.u32 [#allocation10], 4
          %s338 = int_to_ptr.vmem [resolvable:$true] %s337
          %343 = dma.hbm_to_vmem [thread:$0]  %s5, 512, %s338, [#allocation9], 128, 128, 8
        $region24: #{tpu_custom_call.1} parent=11 // pred_fallthru
          _
        // Predicated region
        $region25: #{tpu_custom_call.1} parent=11 // pred_check
          %p344 = pneg %p190
        $region26: #{tpu_custom_call.1} parent=11 // pred_check_branch
          %346 = sbr.rel (%p344) target = $region28
        $region27: #{tpu_custom_call.1} parent=11 // pred_region
          _
        $region28: #{tpu_custom_call.1} parent=11 // pred_fallthru
          _
        // Predicated region
        $region29: #{tpu_custom_call.1} parent=11 // pred_check
          %p347 = pneg %p211
        $region30: #{tpu_custom_call.1} parent=11 // pred_check_branch
          %349 = sbr.rel (%p347) target = $region32
        $region31: #{tpu_custom_call.1} parent=11 // pred_region
          %s351 = ssub.s32 512, 512
          %352 = vsyncadd [#allocation12], %s351
          %s353 = sshll.u32 [#allocation11], 4
          %s354 = int_to_ptr.vmem [resolvable:$true] %s353
          %359 = dma.hbm_to_vmem [thread:$0]  %s7, 512, %s354, [#allocation12], 128, 128, 8
        $region32: #{tpu_custom_call.1} parent=11 // pred_fallthru
          _
        // Predicated region
        $region33: #{tpu_custom_call.1} parent=11 // pred_check
          %p360 = pneg %p232
        $region34: #{tpu_custom_call.1} parent=11 // pred_check_branch
          %362 = sbr.rel (%p360) target = $region36
        $region35: #{tpu_custom_call.1} parent=11 // pred_region
          %s364 = ssub.s32 16, 16
          %365 = vsyncadd [#allocation12], %s364
          %s367 = sshll.u32 [#allocation13], 4
          %s368 = int_to_ptr.vmem [resolvable:$true] %s367
          %370 = dma.hbm_to_vmem [thread:$0]  %s8, 16, %s368, [#allocation12]
        $region36: #{tpu_custom_call.1} parent=11 // pred_fallthru
          _
        // Predicated region
        $region37: #{tpu_custom_call.1} parent=11 // pred_check
          %p371 = pneg %p253
        $region38: #{tpu_custom_call.1} parent=11 // pred_check_branch
          %373 = sbr.rel (%p371) target = $region40
        $region39: #{tpu_custom_call.1} parent=11 // pred_region
          _
        $region40: #{tpu_custom_call.1} parent=11 // pred_fallthru
          _
        // Predicated region
        $region41: #{tpu_custom_call.1} parent=11 // pred_check
          %p374 = pneg %p274
        $region42: #{tpu_custom_call.1} parent=11 // pred_check_branch
          %376 = sbr.rel (%p374) target = $region44
        $region43: #{tpu_custom_call.1} parent=11 // pred_region
          _
        $region44: #{tpu_custom_call.1} parent=11 // pred_fallthru
          _
      $region12: #{tpu_custom_call.1} parent=5 // pred_fallthru
        _
      %p377 = scmp.lt.s32.totalorder %s28, 2
      // Predicated region
      $region45: #{tpu_custom_call.1} parent=5 // pred_check
        %p378 = pneg %p377
      $region46: #{tpu_custom_call.1} parent=5 // pred_check_branch
        %380 = sbr.rel (%p378) target = $region48
      $region47: #{tpu_custom_call.1} parent=5 // pred_region
        // Predicated region
        $region49: #{tpu_custom_call.1} parent=47 // pred_check
          %p381 = pneg %p48
        $region50: #{tpu_custom_call.1} parent=47 // pred_check_branch
          %383 = sbr.rel (%p381) target = $region52
        $region51: #{tpu_custom_call.1} parent=47 // pred_region
          %s384 = sand.u32 %s38, 1
          %s385 = scalar_lea.sflag [#allocation3], %s384
          %s386 = sand.u32 %s38, 1
          %s387 = smul.addr %s386, 8
          %s388 = scalar_lea.vmem [#allocation2], %s387
          %s390 = ssub.s32 128, 128
          %391 = vsyncadd %s385, %s390
          %s392 = smul.addr %s28, 128
          %s393 = scalar_lea.hbm %s0, %s392
          %s395 = sshll.u32 %s388, 4
          %s396 = int_to_ptr.vmem [resolvable:$true] %s395
          %398 = dma.hbm_to_vmem [thread:$0]  %s393, 128, %s396, %s385
        $region52: #{tpu_custom_call.1} parent=47 // pred_fallthru
          _
        // Predicated region
        $region53: #{tpu_custom_call.1} parent=47 // pred_check
          %p399 = pneg %p74
        $region54: #{tpu_custom_call.1} parent=47 // pred_check_branch
          %401 = sbr.rel (%p399) target = $region56
        $region55: #{tpu_custom_call.1} parent=47 // pred_region
          %s402 = sand.u32 %s28, 1
          %s403 = scalar_lea.sflag [#allocation6], %s402
          %s404 = sand.u32 %s64, 1
          %s405 = smul.addr %s404, 8
          %s406 = scalar_lea.vmem [#allocation5], %s405
          %s408 = ssub.s32 128, 128
          %409 = vsyncadd %s403, %s408
          %s410 = smul.addr %s28, 128
          %s411 = scalar_lea.hbm %s1, %s410
          %s413 = sshll.u32 %s406, 4
          %s414 = int_to_ptr.vmem [resolvable:$true] %s413
          %416 = dma.hbm_to_vmem [thread:$0]  %s411, 128, %s414, %s403
        $region56: #{tpu_custom_call.1} parent=47 // pred_fallthru
          _
        // Predicated region
        $region57: #{tpu_custom_call.1} parent=47 // pred_check
          %p417 = pneg %p100
        $region58: #{tpu_custom_call.1} parent=47 // pred_check_branch
          %419 = sbr.rel (%p417) target = $region60
        $region59: #{tpu_custom_call.1} parent=47 // pred_region
          %s420 = sand.u32 %s28, 1
          %s421 = scalar_lea.sflag [#allocation6], %s420
          %s422 = sand.u32 %s90, 1
          %s423 = smul.addr %s422, 8
          %s424 = scalar_lea.vmem [#allocation7], %s423
          %s426 = ssub.s32 128, 128
          %427 = vsyncadd %s421, %s426
          %s428 = smul.addr %s28, 128
          %s429 = scalar_lea.hbm %s2, %s428
          %s431 = sshll.u32 %s424, 4
          %s432 = int_to_ptr.vmem [resolvable:$true] %s431
          %434 = dma.hbm_to_vmem [thread:$0]  %s429, 128, %s432, %s421
        $region60: #{tpu_custom_call.1} parent=47 // pred_fallthru
          _
      $region48: #{tpu_custom_call.1} parent=5 // pred_fallthru
        _
      %p435 = scmp.le.s32.totalorder 1, %s28
      %p436 = scmp.lt.s32.totalorder %s28, 3
      %p437 = pnand %p435, %p436
      %p438 = pneg %p437
      // Predicated region
      $region61: #{tpu_custom_call.1} parent=5 // pred_check
        _
      $region62: #{tpu_custom_call.1} parent=5 // pred_check_branch
        %440 = sbr.rel (%p437) target = $region64
      $region63: #{tpu_custom_call.1} parent=5 // pred_region
        %s441 = ssub.s32 %s28, 1
        %s442 = sand.u32 %s41, 1
        %s443 = scalar_lea.sflag [#allocation3], %s442
        %s444 = sand.u32 %s41, 1
        %s445 = smul.addr %s444, 8
        %s446 = scalar_lea.vmem [#allocation2], %s445
        // Predicated region
        $region65: #{tpu_custom_call.1} parent=63 // pred_check
          %p447 = pneg %p54
        $region66: #{tpu_custom_call.1} parent=63 // pred_check_branch
          %449 = sbr.rel (%p447) target = $region68
        $region67: #{tpu_custom_call.1} parent=63 // pred_region
          %450 = dma.done %s443, 128
        $region68: #{tpu_custom_call.1} parent=63 // pred_fallthru
          _
        %s451 = sand.u32 %s33, 1
        %s452 = scalar_lea.sflag [#allocation6], %s451
        %s453 = sand.u32 %s67, 1
        %s454 = smul.addr %s453, 8
        %s455 = scalar_lea.vmem [#allocation5], %s454
        // Predicated region
        $region69: #{tpu_custom_call.1} parent=63 // pred_check
          %p456 = pneg %p80
        $region70: #{tpu_custom_call.1} parent=63 // pred_check_branch
          %458 = sbr.rel (%p456) target = $region72
        $region71: #{tpu_custom_call.1} parent=63 // pred_region
          %459 = dma.done %s452, 128
        $region72: #{tpu_custom_call.1} parent=63 // pred_fallthru
          _
        %s460 = sand.u32 %s33, 1
        %s461 = scalar_lea.sflag [#allocation6], %s460
        %s462 = sand.u32 %s93, 1
        %s463 = smul.addr %s462, 8
        %s464 = scalar_lea.vmem [#allocation7], %s463
        // Predicated region
        $region73: #{tpu_custom_call.1} parent=63 // pred_check
          %p465 = pneg %p106
        $region74: #{tpu_custom_call.1} parent=63 // pred_check_branch
          %467 = sbr.rel (%p465) target = $region76
        $region75: #{tpu_custom_call.1} parent=63 // pred_region
          %468 = dma.done %s461, 128
        $region76: #{tpu_custom_call.1} parent=63 // pred_fallthru
          _
        // Predicated region
        $region77: #{tpu_custom_call.1} parent=63 // pred_check
          %p469 = pneg %p127
        $region78: #{tpu_custom_call.1} parent=63 // pred_check_branch
          %471 = sbr.rel (%p469) target = $region80
        $region79: #{tpu_custom_call.1} parent=63 // pred_region
          %472 = dma.done [#allocation9], 512
        $region80: #{tpu_custom_call.1} parent=63 // pred_fallthru
          _
        // Predicated region
        $region81: #{tpu_custom_call.1} parent=63 // pred_check
          %p473 = pneg %p169
        $region82: #{tpu_custom_call.1} parent=63 // pred_check_branch
          %475 = sbr.rel (%p473) target = $region84
        $region83: #{tpu_custom_call.1} parent=63 // pred_region
          %476 = dma.done [#allocation9], 512
        $region84: #{tpu_custom_call.1} parent=63 // pred_fallthru
          _
        // Predicated region
        $region85: #{tpu_custom_call.1} parent=63 // pred_check
          %p477 = pneg %p211
        $region86: #{tpu_custom_call.1} parent=63 // pred_check_branch
          %479 = sbr.rel (%p477) target = $region88
        $region87: #{tpu_custom_call.1} parent=63 // pred_region
          %480 = dma.done [#allocation12], 512
        $region88: #{tpu_custom_call.1} parent=63 // pred_fallthru
          _
        // Predicated region
        $region89: #{tpu_custom_call.1} parent=63 // pred_check
          %p481 = pneg %p232
        $region90: #{tpu_custom_call.1} parent=63 // pred_check_branch
          %483 = sbr.rel (%p481) target = $region92
        $region91: #{tpu_custom_call.1} parent=63 // pred_region
          %484 = dma.done [#allocation12], 16
        $region92: #{tpu_custom_call.1} parent=63 // pred_fallthru
          _
        %s485 = sand.u32 %s41, 1
        %s486 = scalar_lea.sflag [#allocation3], %s485
        %s487 = sand.u32 %s41, 1
        %s488 = smul.addr %s487, 8
        %s489 = scalar_lea.vmem [#allocation2], %s488
        %p490 = pneg %p54
        %p491 = pneg %p51
        %s492 = sand.u32 %s33, 1
        %s493 = scalar_lea.sflag [#allocation6], %s492
        %s494 = sand.u32 %s67, 1
        %s495 = smul.addr %s494, 8
        %s496 = scalar_lea.vmem [#allocation5], %s495
        %p497 = pneg %p80
        %p498 = pneg %p77
        %s499 = sand.u32 %s33, 1
        %s500 = scalar_lea.sflag [#allocation6], %s499
        %s501 = sand.u32 %s93, 1
        %s502 = smul.addr %s501, 8
        %s503 = scalar_lea.vmem [#allocation7], %s502
        %p504 = pneg %p106
        %p505 = pneg %p103
        %p506 = pneg %p127
        %p507 = pneg %p124
        %p508 = pneg %p148
        %p509 = pneg %p145
        %p510 = pneg %p169
        %p511 = pneg %p166
        %p512 = pneg %p190
        %p513 = pneg %p187
        %p514 = pneg %p211
        %p515 = pneg %p208
        %p516 = pneg %p232
        %p517 = pneg %p229
        %p518 = pneg %p253
        %p519 = pneg %p250
        %p520 = pneg %p274
        %p521 = pneg %p271
        %p522 = pneg %p300
        %p523 = pneg %p297
        %s524 = sand.u32 %s287, 1
        %s525 = scalar_lea.sflag [#allocation4], %s524
        %s526 = sand.u32 %s287, 1
        %s527 = smul.addr %s526, 8
        %s528 = scalar_lea.vmem [#allocation14], %s527
        %v529 = vld [vmem:[%s446] sm:$0xff]
        %v530 = vld [vmem:[%s455] sm:$0xff]
        %v531 = vld [vmem:[%s464] sm:$0xff]
        %v532 = vld [vmem:[#allocation8] sm:$0xff]
        %v533 = vld [vmem:[#allocation8 + $0x8] sm:$0xff]
        %v534 = vld [vmem:[#allocation8 + $0x10] sm:$0xff]
        %v535 = vld [vmem:[#allocation8 + $0x18] sm:$0xff]
        %v536 = vld [vmem:[%s4] sm:$0x1]
        %v538 = vlaneseq
        %v539 = vshrl.u32 %v538, 7
        %v540 = vsub.s32 0, %v539
        %v541 = vrot.slane %v536, %v540
        %vm543 = vcmask 261120
        %v545 = vsel %vm543, %v529, 0
        %547 = vmatprep.subr.mxu0 0.0
        %548 = vmatpush1.msra.mxu0 %v532
        %549 = vmatprep.subr.mxu0 0.0
        %550 = vmatpush1.msra.mxu0 %v533
        %551 = vmatprep.subr.mxu0 0.0
        %552 = vmatpush1.msra.mxu0 %v534
        %553 = vmatprep.subr.mxu0 0.0
        %554 = vmatpush1.msra.mxu0 %v535
        %555 = vmatprep.subr.mxu0 0.0
        %556 = vmatpush1.msra.mxu0 0.0
        %557 = vmatprep.subr.mxu0 0.0
        %558 = vmatpush1.msra.mxu0 0.0
        %559 = vmatprep.subr.mxu0 0.0
        %560 = vmatpush1.msra.mxu0 0.0
        %561 = vmatprep.subr.mxu0 0.0
        %562 = vmatpush1.msra.mxu0 0.0
        %563 = vmatprep.subr.mxu0 0.0
        %564 = vmatpush1.msra.mxu0 0.0
        %565 = vmatprep.subr.mxu0 0.0
        %566 = vmatpush1.msra.mxu0 0.0
        %567 = vmatprep.subr.mxu0 0.0
        %568 = vmatpush1.msra.mxu0 0.0
        %569 = vmatprep.subr.mxu0 0.0
        %570 = vmatpush1.msra.mxu0 0.0
        %571 = vmatprep.subr.mxu0 0.0
        %572 = vmatpush1.msra.mxu0 0.0
        %573 = vmatprep.subr.mxu0 0.0
        %574 = vmatpush1.msra.mxu0 0.0
        %575 = vmatprep.subr.mxu0 0.0
        %576 = vmatpush1.msra.mxu0 0.0
        %577 = vmatprep.subr.mxu0 0.0
        %578 = vmatpush1.msra.mxu0 0.0
        %579 = vmatprep.subr.mxu0 0.0
        %580 = vmatpush1.msra.mxu0 0.0
        %581 = vmatprep.subr.mxu0 0.0
        %582 = vmatpush1.msra.mxu0 0.0
        %583 = vmatprep.subr.mxu0 0.0
        %584 = vmatpush1.msra.mxu0 0.0
        %585 = vmatprep.subr.mxu0 0.0
        %586 = vmatpush1.msra.mxu0 0.0
        %587 = vmatprep.subr.mxu0 0.0
        %588 = vmatpush1.msra.mxu0 0.0
        %589 = vmatprep.subr.mxu0 0.0
        %590 = vmatpush1.msra.mxu0 0.0
        %591 = vmatprep.subr.mxu0 0.0
        %592 = vmatpush1.msra.mxu0 0.0
        %593 = vmatprep.subr.mxu0 0.0
        %594 = vmatpush1.msra.mxu0 0.0
        %595 = vmatprep.subr.mxu0 0.0
        %596 = vmatpush1.msra.mxu0 0.0
        %597 = vmatprep.subr.mxu0 0.0
        %598 = vmatpush1.msra.mxu0 0.0
        %599 = vmatprep.subr.mxu0 0.0
        %600 = vmatpush1.msra.mxu0 0.0
        %601 = vmatprep.subr.mxu0 0.0
        %602 = vmatpush1.msra.mxu0 0.0
        %603 = vmatprep.subr.mxu0 0.0
        %604 = vmatpush1.msra.mxu0 0.0
        %605 = vmatprep.subr.mxu0 0.0
        %606 = vmatpush1.msra.mxu0 0.0
        %607 = vmatprep.subr.mxu0 0.0
        %608 = vmatpush1.msra.mxu0 0.0
        %609 = vmatprep.subr.mxu0 0.0
        %610 = vmatpush1.msra.mxu0 0.0
        %611 = vmatprep.mubr.f32.mxu0 0.0
        %612 = vmatmul.mubr.f32.gmra.mrb[0].mxu0 %v545
        %v613 = vpop.f32.mrb[0].mxu0
        %v614 = vadd.f32 %v541, %v613
        %v615 = vpop.f32.mrb[0].mxu0
        %616 = vdwg.mxu0
        %v617 = vmul.f32 %v614, 0.35355338
        %v618 = vld [vmem:[#allocation10] sm:$0xff]
        %v619 = vld [vmem:[#allocation10 + $0x8] sm:$0xff]
        %v620 = vld [vmem:[#allocation10 + $0x10] sm:$0xff]
        %v621 = vld [vmem:[#allocation10 + $0x18] sm:$0xff]
        %v622 = vld [vmem:[%s6] sm:$0x1]
        %v624 = vlaneseq
        %v625 = vshrl.u32 %v624, 7
        %v626 = vsub.s32 0, %v625
        %v627 = vrot.slane %v622, %v626
        %v630 = vsel %vm543, %v530, 0
        %632 = vmatprep.subr.mxu0 0.0
        %633 = vmatpush1.msra.mxu0 %v618
        %634 = vmatprep.subr.mxu0 0.0
        %635 = vmatpush1.msra.mxu0 %v619
        %636 = vmatprep.subr.mxu0 0.0
        %637 = vmatpush1.msra.mxu0 %v620
        %638 = vmatprep.subr.mxu0 0.0
        %639 = vmatpush1.msra.mxu0 %v621
        %640 = vmatprep.subr.mxu0 0.0
        %641 = vmatpush1.msra.mxu0 0.0
        %642 = vmatprep.subr.mxu0 0.0
        %643 = vmatpush1.msra.mxu0 0.0
        %644 = vmatprep.subr.mxu0 0.0
        %645 = vmatpush1.msra.mxu0 0.0
        %646 = vmatprep.subr.mxu0 0.0
        %647 = vmatpush1.msra.mxu0 0.0
        %648 = vmatprep.subr.mxu0 0.0
        %649 = vmatpush1.msra.mxu0 0.0
        %650 = vmatprep.subr.mxu0 0.0
        %651 = vmatpush1.msra.mxu0 0.0
        %652 = vmatprep.subr.mxu0 0.0
        %653 = vmatpush1.msra.mxu0 0.0
        %654 = vmatprep.subr.mxu0 0.0
        %655 = vmatpush1.msra.mxu0 0.0
        %656 = vmatprep.subr.mxu0 0.0
        %657 = vmatpush1.msra.mxu0 0.0
        %658 = vmatprep.subr.mxu0 0.0
        %659 = vmatpush1.msra.mxu0 0.0
        %660 = vmatprep.subr.mxu0 0.0
        %661 = vmatpush1.msra.mxu0 0.0
        %662 = vmatprep.subr.mxu0 0.0
        %663 = vmatpush1.msra.mxu0 0.0
        %664 = vmatprep.subr.mxu0 0.0
        %665 = vmatpush1.msra.mxu0 0.0
        %666 = vmatprep.subr.mxu0 0.0
        %667 = vmatpush1.msra.mxu0 0.0
        %668 = vmatprep.subr.mxu0 0.0
        %669 = vmatpush1.msra.mxu0 0.0
        %670 = vmatprep.subr.mxu0 0.0
        %671 = vmatpush1.msra.mxu0 0.0
        %672 = vmatprep.subr.mxu0 0.0
        %673 = vmatpush1.msra.mxu0 0.0
        %674 = vmatprep.subr.mxu0 0.0
        %675 = vmatpush1.msra.mxu0 0.0
        %676 = vmatprep.subr.mxu0 0.0
        %677 = vmatpush1.msra.mxu0 0.0
        %678 = vmatprep.subr.mxu0 0.0
        %679 = vmatpush1.msra.mxu0 0.0
        %680 = vmatprep.subr.mxu0 0.0
        %681 = vmatpush1.msra.mxu0 0.0
        %682 = vmatprep.subr.mxu0 0.0
        %683 = vmatpush1.msra.mxu0 0.0
        %684 = vmatprep.subr.mxu0 0.0
        %685 = vmatpush1.msra.mxu0 0.0
        %686 = vmatprep.subr.mxu0 0.0
        %687 = vmatpush1.msra.mxu0 0.0
        %688 = vmatprep.subr.mxu0 0.0
        %689 = vmatpush1.msra.mxu0 0.0
        %690 = vmatprep.subr.mxu0 0.0
        %691 = vmatpush1.msra.mxu0 0.0
        %692 = vmatprep.subr.mxu0 0.0
        %693 = vmatpush1.msra.mxu0 0.0
        %694 = vmatprep.subr.mxu0 0.0
        %695 = vmatpush1.msra.mxu0 0.0
        %696 = vmatprep.mubr.f32.mxu0 0.0
        %697 = vmatmul.mubr.f32.gmra.mrb[0].mxu0 %v630
        %v698 = vpop.f32.mrb[0].mxu0
        %v699 = vadd.f32 %v627, %v698
        %v700 = vpop.f32.mrb[0].mxu0
        %701 = vdwg.mxu0
        %v702 = vld [vmem:[#allocation11] sm:$0xff]
        %v703 = vld [vmem:[#allocation11 + $0x8] sm:$0xff]
        %v704 = vld [vmem:[#allocation11 + $0x10] sm:$0xff]
        %v705 = vld [vmem:[#allocation11 + $0x18] sm:$0xff]
        %v706 = vld [vmem:[#allocation13] sm:$0x1]
        %v708 = vlaneseq
        %v709 = vshrl.u32 %v708, 7
        %v710 = vsub.s32 0, %v709
        %v711 = vrot.slane %v706, %v710
        %v714 = vsel %vm543, %v531, 0
        %716 = vmatprep.subr.mxu0 0.0
        %717 = vmatpush1.msra.mxu0 %v702
        %718 = vmatprep.subr.mxu0 0.0
        %719 = vmatpush1.msra.mxu0 %v703
        %720 = vmatprep.subr.mxu0 0.0
        %721 = vmatpush1.msra.mxu0 %v704
        %722 = vmatprep.subr.mxu0 0.0
        %723 = vmatpush1.msra.mxu0 %v705
        %724 = vmatprep.subr.mxu0 0.0
        %725 = vmatpush1.msra.mxu0 0.0
        %726 = vmatprep.subr.mxu0 0.0
        %727 = vmatpush1.msra.mxu0 0.0
        %728 = vmatprep.subr.mxu0 0.0
        %729 = vmatpush1.msra.mxu0 0.0
        %730 = vmatprep.subr.mxu0 0.0
        %731 = vmatpush1.msra.mxu0 0.0
        %732 = vmatprep.subr.mxu0 0.0
        %733 = vmatpush1.msra.mxu0 0.0
        %734 = vmatprep.subr.mxu0 0.0
        %735 = vmatpush1.msra.mxu0 0.0
        %736 = vmatprep.subr.mxu0 0.0
        %737 = vmatpush1.msra.mxu0 0.0
        %738 = vmatprep.subr.mxu0 0.0
        %739 = vmatpush1.msra.mxu0 0.0
        %740 = vmatprep.subr.mxu0 0.0
        %741 = vmatpush1.msra.mxu0 0.0
        %742 = vmatprep.subr.mxu0 0.0
        %743 = vmatpush1.msra.mxu0 0.0
        %744 = vmatprep.subr.mxu0 0.0
        %745 = vmatpush1.msra.mxu0 0.0
        %746 = vmatprep.subr.mxu0 0.0
        %747 = vmatpush1.msra.mxu0 0.0
        %748 = vmatprep.subr.mxu0 0.0
        %749 = vmatpush1.msra.mxu0 0.0
        %750 = vmatprep.subr.mxu0 0.0
        %751 = vmatpush1.msra.mxu0 0.0
        %752 = vmatprep.subr.mxu0 0.0
        %753 = vmatpush1.msra.mxu0 0.0
        %754 = vmatprep.subr.mxu0 0.0
        %755 = vmatpush1.msra.mxu0 0.0
        %756 = vmatprep.subr.mxu0 0.0
        %757 = vmatpush1.msra.mxu0 0.0
        %758 = vmatprep.subr.mxu0 0.0
        %759 = vmatpush1.msra.mxu0 0.0
        %760 = vmatprep.subr.mxu0 0.0
        %761 = vmatpush1.msra.mxu0 0.0
        %762 = vmatprep.subr.mxu0 0.0
        %763 = vmatpush1.msra.mxu0 0.0
        %764 = vmatprep.subr.mxu0 0.0
        %765 = vmatpush1.msra.mxu0 0.0
        %766 = vmatprep.subr.mxu0 0.0
        %767 = vmatpush1.msra.mxu0 0.0
        %768 = vmatprep.subr.mxu0 0.0
        %769 = vmatpush1.msra.mxu0 0.0
        %770 = vmatprep.subr.mxu0 0.0
        %771 = vmatpush1.msra.mxu0 0.0
        %772 = vmatprep.subr.mxu0 0.0
        %773 = vmatpush1.msra.mxu0 0.0
        %774 = vmatprep.subr.mxu0 0.0
        %775 = vmatpush1.msra.mxu0 0.0
        %776 = vmatprep.subr.mxu0 0.0
        %777 = vmatpush1.msra.mxu0 0.0
        %778 = vmatprep.subr.mxu0 0.0
        %779 = vmatpush1.msra.mxu0 0.0
        %780 = vmatprep.mubr.f32.mxu0 0.0
        %781 = vmatmul.mubr.f32.gmra.mrb[0].mxu0 %v714
        %v782 = vpop.f32.mrb[0].mxu0
        %v783 = vadd.f32 %v711, %v782
        %v784 = vpop.f32.mrb[0].mxu0
        %785 = vdwg.mxu0
        %vm786 = vcmask 64512
        %v788 = vsel %vm786, %v617, 0
        %v791 = vsel %vm786, %v699, 0
        %793 = vmatprep.subr.mxu0 0.0
        %794 = vmatpush1.xpose.msra.mxu0 %v791
        %795 = vmatprep.subr.mxu0 0.0
        %796 = vmatpush1.xpose.msra.mxu0 0.0
        %797 = vmatprep.subr.mxu0 0.0
        %798 = vmatpush1.xpose.msra.mxu0 0.0
        %799 = vmatprep.subr.mxu0 0.0
        %800 = vmatpush1.xpose.msra.mxu0 0.0
        %801 = vmatprep.subr.mxu0 0.0
        %802 = vmatpush1.xpose.msra.mxu0 0.0
        %803 = vmatprep.subr.mxu0 0.0
        %804 = vmatpush1.xpose.msra.mxu0 0.0
        %805 = vmatprep.subr.mxu0 0.0
        %806 = vmatpush1.xpose.msra.mxu0 0.0
        %807 = vmatprep.subr.mxu0 0.0
        %808 = vmatpush1.xpose.msra.mxu0 0.0
        %809 = vmatprep.subr.mxu0 0.0
        %810 = vmatpush1.xpose.msra.mxu0 0.0
        %811 = vmatprep.subr.mxu0 0.0
        %812 = vmatpush1.xpose.msra.mxu0 0.0
        %813 = vmatprep.subr.mxu0 0.0
        %814 = vmatpush1.xpose.msra.mxu0 0.0
        %815 = vmatprep.subr.mxu0 0.0
        %816 = vmatpush1.xpose.msra.mxu0 0.0
        %817 = vmatprep.subr.mxu0 0.0
        %818 = vmatpush1.xpose.msra.mxu0 0.0
        %819 = vmatprep.subr.mxu0 0.0
        %820 = vmatpush1.xpose.msra.mxu0 0.0
        %821 = vmatprep.subr.mxu0 0.0
        %822 = vmatpush1.xpose.msra.mxu0 0.0
        %823 = vmatprep.subr.mxu0 0.0
        %824 = vmatpush1.xpose.msra.mxu0 0.0
        %825 = vmatprep.subr.mxu0 0.0
        %826 = vmatpush1.xpose.msra.mxu0 0.0
        %827 = vmatprep.subr.mxu0 0.0
        %828 = vmatpush1.xpose.msra.mxu0 0.0
        %829 = vmatprep.subr.mxu0 0.0
        %830 = vmatpush1.xpose.msra.mxu0 0.0
        %831 = vmatprep.subr.mxu0 0.0
        %832 = vmatpush1.xpose.msra.mxu0 0.0
        %833 = vmatprep.subr.mxu0 0.0
        %834 = vmatpush1.xpose.msra.mxu0 0.0
        %835 = vmatprep.subr.mxu0 0.0
        %836 = vmatpush1.xpose.msra.mxu0 0.0
        %837 = vmatprep.subr.mxu0 0.0
        %838 = vmatpush1.xpose.msra.mxu0 0.0
        %839 = vmatprep.subr.mxu0 0.0
        %840 = vmatpush1.xpose.msra.mxu0 0.0
        %841 = vmatprep.subr.mxu0 0.0
        %842 = vmatpush1.xpose.msra.mxu0 0.0
        %843 = vmatprep.subr.mxu0 0.0
        %844 = vmatpush1.xpose.msra.mxu0 0.0
        %845 = vmatprep.subr.mxu0 0.0
        %846 = vmatpush1.xpose.msra.mxu0 0.0
        %847 = vmatprep.subr.mxu0 0.0
        %848 = vmatpush1.xpose.msra.mxu0 0.0
        %849 = vmatprep.subr.mxu0 0.0
        %850 = vmatpush1.xpose.msra.mxu0 0.0
        %851 = vmatprep.subr.mxu0 0.0
        %852 = vmatpush1.xpose.msra.mxu0 0.0
        %853 = vmatprep.subr.mxu0 0.0
        %854 = vmatpush1.xpose.msra.mxu0 0.0
        %855 = vmatprep.subr.mxu0 0.0
        %856 = vmatpush1.xpose.msra.mxu0 0.0
        %857 = vmatprep.mubr.f32.mxu0 0.0
        %858 = vmatmul.mubr.f32.gmra.mrb[0].mxu0 %v788
        %v859 = vpop.f32.mrb[0].mxu0
        %v860 = vadd.f32 0.0, %v859
        %v861 = vpop.f32.mrb[0].mxu0
        %862 = vdwg.mxu0
        %v863 = vsel %vm786, %v860, -inf
        %864 = vmax.xlane.f32.xlu0 %v863
        %v865 = vpop.xlane.xlu0 %864
        %v866 = vsub.f32 %v860, %v865
        %v867 = vmul.f32 %v866, 1.442695
        %v868 = vpow.pop %v867
        %v869 = vsel %vm786, %v868, 0.0
        %870 = vadd.xlane.f32.xlu0 %v869
        %v871 = vpop.xlane.xlu0 %870
        %v873 = vsel %vm786, %v868, 0
        %875 = vmatprep.subr.mxu0 0.0
        %876 = vmatpush1.msra.mxu0 %v783
        %877 = vmatprep.subr.mxu0 0.0
        %878 = vmatpush1.msra.mxu0 0.0
        %879 = vmatprep.subr.mxu0 0.0
        %880 = vmatpush1.msra.mxu0 0.0
        %881 = vmatprep.subr.mxu0 0.0
        %882 = vmatpush1.msra.mxu0 0.0
        %883 = vmatprep.subr.mxu0 0.0
        %884 = vmatpush1.msra.mxu0 0.0
        %885 = vmatprep.subr.mxu0 0.0
        %886 = vmatpush1.msra.mxu0 0.0
        %887 = vmatprep.subr.mxu0 0.0
        %888 = vmatpush1.msra.mxu0 0.0
        %889 = vmatprep.subr.mxu0 0.0
        %890 = vmatpush1.msra.mxu0 0.0
        %891 = vmatprep.subr.mxu0 0.0
        %892 = vmatpush1.msra.mxu0 0.0
        %893 = vmatprep.subr.mxu0 0.0
        %894 = vmatpush1.msra.mxu0 0.0
        %895 = vmatprep.subr.mxu0 0.0
        %896 = vmatpush1.msra.mxu0 0.0
        %897 = vmatprep.subr.mxu0 0.0
        %898 = vmatpush1.msra.mxu0 0.0
        %899 = vmatprep.subr.mxu0 0.0
        %900 = vmatpush1.msra.mxu0 0.0
        %901 = vmatprep.subr.mxu0 0.0
        %902 = vmatpush1.msra.mxu0 0.0
        %903 = vmatprep.subr.mxu0 0.0
        %904 = vmatpush1.msra.mxu0 0.0
        %905 = vmatprep.subr.mxu0 0.0
        %906 = vmatpush1.msra.mxu0 0.0
        %907 = vmatprep.subr.mxu0 0.0
        %908 = vmatpush1.msra.mxu0 0.0
        %909 = vmatprep.subr.mxu0 0.0
        %910 = vmatpush1.msra.mxu0 0.0
        %911 = vmatprep.subr.mxu0 0.0
        %912 = vmatpush1.msra.mxu0 0.0
        %913 = vmatprep.subr.mxu0 0.0
        %914 = vmatpush1.msra.mxu0 0.0
        %915 = vmatprep.subr.mxu0 0.0
        %916 = vmatpush1.msra.mxu0 0.0
        %917 = vmatprep.subr.mxu0 0.0
        %918 = vmatpush1.msra.mxu0 0.0
        %919 = vmatprep.subr.mxu0 0.0
        %920 = vmatpush1.msra.mxu0 0.0
        %921 = vmatprep.subr.mxu0 0.0
        %922 = vmatpush1.msra.mxu0 0.0
        %923 = vmatprep.subr.mxu0 0.0
        %924 = vmatpush1.msra.mxu0 0.0
        %925 = vmatprep.subr.mxu0 0.0
        %926 = vmatpush1.msra.mxu0 0.0
        %927 = vmatprep.subr.mxu0 0.0
        %928 = vmatpush1.msra.mxu0 0.0
        %929 = vmatprep.subr.mxu0 0.0
        %930 = vmatpush1.msra.mxu0 0.0
        %931 = vmatprep.subr.mxu0 0.0
        %932 = vmatpush1.msra.mxu0 0.0
        %933 = vmatprep.subr.mxu0 0.0
        %934 = vmatpush1.msra.mxu0 0.0
        %935 = vmatprep.subr.mxu0 0.0
        %936 = vmatpush1.msra.mxu0 0.0
        %937 = vmatprep.subr.mxu0 0.0
        %938 = vmatpush1.msra.mxu0 0.0
        %939 = vmatprep.mubr.f32.mxu0 0.0
        %940 = vmatmul.mubr.f32.gmra.mrb[0].mxu0 %v873
        %v941 = vpop.f32.mrb[0].mxu0
        %v942 = vadd.f32 0.0, %v941
        %v943 = vpop.f32.mrb[0].mxu0
        %944 = vdwg.mxu0
        %v945 = vrcp.pop %v871
        %v946 = vmul.f32 %v942, %v945
        %v947 = vld [vmem:[%s9] sm:$0xff]
        %948 = vrot.lane.b32.xlu0 %v617, 120
        %v949 = vpop.permute.xlu0 %948
        %950 = vrot.lane.b32.xlu0 %v699, 120
        %v951 = vpop.permute.xlu0 %950
        %v952 = vsel %vm786, %v949, 0
        %v954 = vsel %vm786, %v951, 0
        %956 = vmatprep.subr.mxu0 0.0
        %957 = vmatpush1.xpose.msra.mxu0 %v954
        %958 = vmatprep.subr.mxu0 0.0
        %959 = vmatpush1.xpose.msra.mxu0 0.0
        %960 = vmatprep.subr.mxu0 0.0
        %961 = vmatpush1.xpose.msra.mxu0 0.0
        %962 = vmatprep.subr.mxu0 0.0
        %963 = vmatpush1.xpose.msra.mxu0 0.0
        %964 = vmatprep.subr.mxu0 0.0
        %965 = vmatpush1.xpose.msra.mxu0 0.0
        %966 = vmatprep.subr.mxu0 0.0
        %967 = vmatpush1.xpose.msra.mxu0 0.0
        %968 = vmatprep.subr.mxu0 0.0
        %969 = vmatpush1.xpose.msra.mxu0 0.0
        %970 = vmatprep.subr.mxu0 0.0
        %971 = vmatpush1.xpose.msra.mxu0 0.0
        %972 = vmatprep.subr.mxu0 0.0
        %973 = vmatpush1.xpose.msra.mxu0 0.0
        %974 = vmatprep.subr.mxu0 0.0
        %975 = vmatpush1.xpose.msra.mxu0 0.0
        %976 = vmatprep.subr.mxu0 0.0
        %977 = vmatpush1.xpose.msra.mxu0 0.0
        %978 = vmatprep.subr.mxu0 0.0
        %979 = vmatpush1.xpose.msra.mxu0 0.0
        %980 = vmatprep.subr.mxu0 0.0
        %981 = vmatpush1.xpose.msra.mxu0 0.0
        %982 = vmatprep.subr.mxu0 0.0
        %983 = vmatpush1.xpose.msra.mxu0 0.0
        %984 = vmatprep.subr.mxu0 0.0
        %985 = vmatpush1.xpose.msra.mxu0 0.0
        %986 = vmatprep.subr.mxu0 0.0
        %987 = vmatpush1.xpose.msra.mxu0 0.0
        %988 = vmatprep.subr.mxu0 0.0
        %989 = vmatpush1.xpose.msra.mxu0 0.0
        %990 = vmatprep.subr.mxu0 0.0
        %991 = vmatpush1.xpose.msra.mxu0 0.0
        %992 = vmatprep.subr.mxu0 0.0
        %993 = vmatpush1.xpose.msra.mxu0 0.0
        %994 = vmatprep.subr.mxu0 0.0
        %995 = vmatpush1.xpose.msra.mxu0 0.0
        %996 = vmatprep.subr.mxu0 0.0
        %997 = vmatpush1.xpose.msra.mxu0 0.0
        %998 = vmatprep.subr.mxu0 0.0
        %999 = vmatpush1.xpose.msra.mxu0 0.0
        %1000 = vmatprep.subr.mxu0 0.0
        %1001 = vmatpush1.xpose.msra.mxu0 0.0
        %1002 = vmatprep.subr.mxu0 0.0
        %1003 = vmatpush1.xpose.msra.mxu0 0.0
        %1004 = vmatprep.subr.mxu0 0.0
        %1005 = vmatpush1.xpose.msra.mxu0 0.0
        %1006 = vmatprep.subr.mxu0 0.0
        %1007 = vmatpush1.xpose.msra.mxu0 0.0
        %1008 = vmatprep.subr.mxu0 0.0
        %1009 = vmatpush1.xpose.msra.mxu0 0.0
        %1010 = vmatprep.subr.mxu0 0.0
        %1011 = vmatpush1.xpose.msra.mxu0 0.0
        %1012 = vmatprep.subr.mxu0 0.0
        %1013 = vmatpush1.xpose.msra.mxu0 0.0
        %1014 = vmatprep.subr.mxu0 0.0
        %1015 = vmatpush1.xpose.msra.mxu0 0.0
        %1016 = vmatprep.subr.mxu0 0.0
        %1017 = vmatpush1.xpose.msra.mxu0 0.0
        %1018 = vmatprep.subr.mxu0 0.0
        %1019 = vmatpush1.xpose.msra.mxu0 0.0
        %1020 = vmatprep.mubr.f32.mxu0 0.0
        %1021 = vmatmul.mubr.f32.gmra.mrb[0].mxu0 %v952
        %v1022 = vpop.f32.mrb[0].mxu0
        %v1023 = vadd.f32 0.0, %v1022
        %v1024 = vpop.f32.mrb[0].mxu0
        %1025 = vdwg.mxu0
        %v1026 = vsel %vm786, %v1023, -inf
        %1027 = vmax.xlane.f32.xlu0 %v1026
        %v1028 = vpop.xlane.xlu0 %1027
        %v1029 = vsub.f32 %v1023, %v1028
        %v1030 = vmul.f32 %v1029, 1.442695
        %v1031 = vpow.pop %v1030
        %v1032 = vsel %vm786, %v1031, 0.0
        %1033 = vadd.xlane.f32.xlu0 %v1032
        %v1034 = vpop.xlane.xlu0 %1033
        %1036 = vrot.lane.b32.xlu0 %v783, 120
        %v1037 = vpop.permute.xlu0 %1036
        %v1040 = vsel %vm786, %v1031, 0
        %1042 = vmatprep.subr.mxu0 0.0
        %1043 = vmatpush1.msra.mxu0 %v1037
        %1044 = vmatprep.subr.mxu0 0.0
        %1045 = vmatpush1.msra.mxu0 0.0
        %1046 = vmatprep.subr.mxu0 0.0
        %1047 = vmatpush1.msra.mxu0 0.0
        %1048 = vmatprep.subr.mxu0 0.0
        %1049 = vmatpush1.msra.mxu0 0.0
        %1050 = vmatprep.subr.mxu0 0.0
        %1051 = vmatpush1.msra.mxu0 0.0
        %1052 = vmatprep.subr.mxu0 0.0
        %1053 = vmatpush1.msra.mxu0 0.0
        %1054 = vmatprep.subr.mxu0 0.0
        %1055 = vmatpush1.msra.mxu0 0.0
        %1056 = vmatprep.subr.mxu0 0.0
        %1057 = vmatpush1.msra.mxu0 0.0
        %1058 = vmatprep.subr.mxu0 0.0
        %1059 = vmatpush1.msra.mxu0 0.0
        %1060 = vmatprep.subr.mxu0 0.0
        %1061 = vmatpush1.msra.mxu0 0.0
        %1062 = vmatprep.subr.mxu0 0.0
        %1063 = vmatpush1.msra.mxu0 0.0
        %1064 = vmatprep.subr.mxu0 0.0
        %1065 = vmatpush1.msra.mxu0 0.0
        %1066 = vmatprep.subr.mxu0 0.0
        %1067 = vmatpush1.msra.mxu0 0.0
        %1068 = vmatprep.subr.mxu0 0.0
        %1069 = vmatpush1.msra.mxu0 0.0
        %1070 = vmatprep.subr.mxu0 0.0
        %1071 = vmatpush1.msra.mxu0 0.0
        %1072 = vmatprep.subr.mxu0 0.0
        %1073 = vmatpush1.msra.mxu0 0.0
        %1074 = vmatprep.subr.mxu0 0.0
        %1075 = vmatpush1.msra.mxu0 0.0
        %1076 = vmatprep.subr.mxu0 0.0
        %1077 = vmatpush1.msra.mxu0 0.0
        %1078 = vmatprep.subr.mxu0 0.0
        %1079 = vmatpush1.msra.mxu0 0.0
        %1080 = vmatprep.subr.mxu0 0.0
        %1081 = vmatpush1.msra.mxu0 0.0
        %1082 = vmatprep.subr.mxu0 0.0
        %1083 = vmatpush1.msra.mxu0 0.0
        %1084 = vmatprep.subr.mxu0 0.0
        %1085 = vmatpush1.msra.mxu0 0.0
        %1086 = vmatprep.subr.mxu0 0.0
        %1087 = vmatpush1.msra.mxu0 0.0
        %1088 = vmatprep.subr.mxu0 0.0
        %1089 = vmatpush1.msra.mxu0 0.0
        %1090 = vmatprep.subr.mxu0 0.0
        %1091 = vmatpush1.msra.mxu0 0.0
        %1092 = vmatprep.subr.mxu0 0.0
        %1093 = vmatpush1.msra.mxu0 0.0
        %1094 = vmatprep.subr.mxu0 0.0
        %1095 = vmatpush1.msra.mxu0 0.0
        %1096 = vmatprep.subr.mxu0 0.0
        %1097 = vmatpush1.msra.mxu0 0.0
        %1098 = vmatprep.subr.mxu0 0.0
        %1099 = vmatpush1.msra.mxu0 0.0
        %1100 = vmatprep.subr.mxu0 0.0
        %1101 = vmatpush1.msra.mxu0 0.0
        %1102 = vmatprep.subr.mxu0 0.0
        %1103 = vmatpush1.msra.mxu0 0.0
        %1104 = vmatprep.subr.mxu0 0.0
        %1105 = vmatpush1.msra.mxu0 0.0
        %1106 = vmatprep.mubr.f32.mxu0 0.0
        %1107 = vmatmul.mubr.f32.gmra.mrb[0].mxu0 %v1040
        %v1108 = vpop.f32.mrb[0].mxu0
        %v1109 = vadd.f32 0.0, %v1108
        %v1110 = vpop.f32.mrb[0].mxu0
        %1111 = vdwg.mxu0
        %v1112 = vrcp.pop %v1034
        %v1113 = vmul.f32 %v1109, %v1112
        %s1114 = scalar_lea.vmem %s9, 8
        %v1115 = vld [vmem:[%s1114] sm:$0xff]
        %v1117 = vsel %vm786, %v1113, 0
        %1119 = vmatprep.subr.mxu0 0.0
        %1120 = vmatpush1.msra.mxu0 %v1115
        %1121 = vmatprep.subr.mxu0 0.0
        %1122 = vmatpush1.msra.mxu0 0.0
        %1123 = vmatprep.subr.mxu0 0.0
        %1124 = vmatpush1.msra.mxu0 0.0
        %1125 = vmatprep.subr.mxu0 0.0
        %1126 = vmatpush1.msra.mxu0 0.0
        %1127 = vmatprep.subr.mxu0 0.0
        %1128 = vmatpush1.msra.mxu0 0.0
        %1129 = vmatprep.subr.mxu0 0.0
        %1130 = vmatpush1.msra.mxu0 0.0
        %1131 = vmatprep.subr.mxu0 0.0
        %1132 = vmatpush1.msra.mxu0 0.0
        %1133 = vmatprep.subr.mxu0 0.0
        %1134 = vmatpush1.msra.mxu0 0.0
        %1135 = vmatprep.subr.mxu0 0.0
        %1136 = vmatpush1.msra.mxu0 0.0
        %1137 = vmatprep.subr.mxu0 0.0
        %1138 = vmatpush1.msra.mxu0 0.0
        %1139 = vmatprep.subr.mxu0 0.0
        %1140 = vmatpush1.msra.mxu0 0.0
        %1141 = vmatprep.subr.mxu0 0.0
        %1142 = vmatpush1.msra.mxu0 0.0
        %1143 = vmatprep.subr.mxu0 0.0
        %1144 = vmatpush1.msra.mxu0 0.0
        %1145 = vmatprep.subr.mxu0 0.0
        %1146 = vmatpush1.msra.mxu0 0.0
        %1147 = vmatprep.subr.mxu0 0.0
        %1148 = vmatpush1.msra.mxu0 0.0
        %1149 = vmatprep.subr.mxu0 0.0
        %1150 = vmatpush1.msra.mxu0 0.0
        %1151 = vmatprep.subr.mxu0 0.0
        %1152 = vmatpush1.msra.mxu0 0.0
        %1153 = vmatprep.subr.mxu0 0.0
        %1154 = vmatpush1.msra.mxu0 0.0
        %1155 = vmatprep.subr.mxu0 0.0
        %1156 = vmatpush1.msra.mxu0 0.0
        %1157 = vmatprep.subr.mxu0 0.0
        %1158 = vmatpush1.msra.mxu0 0.0
        %1159 = vmatprep.subr.mxu0 0.0
        %1160 = vmatpush1.msra.mxu0 0.0
        %1161 = vmatprep.subr.mxu0 0.0
        %1162 = vmatpush1.msra.mxu0 0.0
        %1163 = vmatprep.subr.mxu0 0.0
        %1164 = vmatpush1.msra.mxu0 0.0
        %1165 = vmatprep.subr.mxu0 0.0
        %1166 = vmatpush1.msra.mxu0 0.0
        %1167 = vmatprep.subr.mxu0 0.0
        %1168 = vmatpush1.msra.mxu0 0.0
        %1169 = vmatprep.subr.mxu0 0.0
        %1170 = vmatpush1.msra.mxu0 0.0
        %1171 = vmatprep.subr.mxu0 0.0
        %1172 = vmatpush1.msra.mxu0 0.0
        %1173 = vmatprep.subr.mxu0 0.0
        %1174 = vmatpush1.msra.mxu0 0.0
        %1175 = vmatprep.subr.mxu0 0.0
        %1176 = vmatpush1.msra.mxu0 0.0
        %1177 = vmatprep.subr.mxu0 0.0
        %1178 = vmatpush1.msra.mxu0 0.0
        %1179 = vmatprep.subr.mxu0 0.0
        %1180 = vmatpush1.msra.mxu0 0.0
        %1181 = vmatprep.subr.mxu0 0.0
        %1182 = vmatpush1.msra.mxu0 0.0
        %1183 = vmatprep.mubr.f32.mxu0 0.0
        %1184 = vmatmul.mubr.f32.gmra.mrb[0].mxu0 %v1117
        %v1185 = vpop.f32.mrb[0].mxu0
        %v1186 = vadd.f32 0.0, %v1185
        %v1187 = vpop.f32.mrb[0].mxu0
        %1188 = vdwg.mxu0
        %v1190 = vsel %vm786, %v946, 0
        %1192 = vmatprep.subr.mxu0 0.0
        %1193 = vmatpush1.msra.mxu0 %v947
        %1194 = vmatprep.subr.mxu0 0.0
        %1195 = vmatpush1.msra.mxu0 0.0
        %1196 = vmatprep.subr.mxu0 0.0
        %1197 = vmatpush1.msra.mxu0 0.0
        %1198 = vmatprep.subr.mxu0 0.0
        %1199 = vmatpush1.msra.mxu0 0.0
        %1200 = vmatprep.subr.mxu0 0.0
        %1201 = vmatpush1.msra.mxu0 0.0
        %1202 = vmatprep.subr.mxu0 0.0
        %1203 = vmatpush1.msra.mxu0 0.0
        %1204 = vmatprep.subr.mxu0 0.0
        %1205 = vmatpush1.msra.mxu0 0.0
        %1206 = vmatprep.subr.mxu0 0.0
        %1207 = vmatpush1.msra.mxu0 0.0
        %1208 = vmatprep.subr.mxu0 0.0
        %1209 = vmatpush1.msra.mxu0 0.0
        %1210 = vmatprep.subr.mxu0 0.0
        %1211 = vmatpush1.msra.mxu0 0.0
        %1212 = vmatprep.subr.mxu0 0.0
        %1213 = vmatpush1.msra.mxu0 0.0
        %1214 = vmatprep.subr.mxu0 0.0
        %1215 = vmatpush1.msra.mxu0 0.0
        %1216 = vmatprep.subr.mxu0 0.0
        %1217 = vmatpush1.msra.mxu0 0.0
        %1218 = vmatprep.subr.mxu0 0.0
        %1219 = vmatpush1.msra.mxu0 0.0
        %1220 = vmatprep.subr.mxu0 0.0
        %1221 = vmatpush1.msra.mxu0 0.0
        %1222 = vmatprep.subr.mxu0 0.0
        %1223 = vmatpush1.msra.mxu0 0.0
        %1224 = vmatprep.subr.mxu0 0.0
        %1225 = vmatpush1.msra.mxu0 0.0
        %1226 = vmatprep.subr.mxu0 0.0
        %1227 = vmatpush1.msra.mxu0 0.0
        %1228 = vmatprep.subr.mxu0 0.0
        %1229 = vmatpush1.msra.mxu0 0.0
        %1230 = vmatprep.subr.mxu0 0.0
        %1231 = vmatpush1.msra.mxu0 0.0
        %1232 = vmatprep.subr.mxu0 0.0
        %1233 = vmatpush1.msra.mxu0 0.0
        %1234 = vmatprep.subr.mxu0 0.0
        %1235 = vmatpush1.msra.mxu0 0.0
        %1236 = vmatprep.subr.mxu0 0.0
        %1237 = vmatpush1.msra.mxu0 0.0
        %1238 = vmatprep.subr.mxu0 0.0
        %1239 = vmatpush1.msra.mxu0 0.0
        %1240 = vmatprep.subr.mxu0 0.0
        %1241 = vmatpush1.msra.mxu0 0.0
        %1242 = vmatprep.subr.mxu0 0.0
        %1243 = vmatpush1.msra.mxu0 0.0
        %1244 = vmatprep.subr.mxu0 0.0
        %1245 = vmatpush1.msra.mxu0 0.0
        %1246 = vmatprep.subr.mxu0 0.0
        %1247 = vmatpush1.msra.mxu0 0.0
        %1248 = vmatprep.subr.mxu0 0.0
        %1249 = vmatpush1.msra.mxu0 0.0
        %1250 = vmatprep.subr.mxu0 0.0
        %1251 = vmatpush1.msra.mxu0 0.0
        %1252 = vmatprep.subr.mxu0 0.0
        %1253 = vmatpush1.msra.mxu0 0.0
        %1254 = vmatprep.subr.mxu0 0.0
        %1255 = vmatpush1.msra.mxu0 0.0
        %1256 = vmatprep.mubr.f32.mxu0 0.0
        %1257 = vmatmul.mubr.f32.gmra.mrb[0].mxu0 %v1190
        %v1258 = vpop.f32.mrb[0].mxu0
        %v1259 = vadd.f32 %v1186, %v1258
        %v1260 = vpop.f32.mrb[0].mxu0
        %1261 = vdwg.mxu0
        %1262 = vrot.lane.b32.xlu0 %v617, 112
        %v1263 = vpop.permute.xlu0 %1262
        %1264 = vrot.lane.b32.xlu0 %v699, 112
        %v1265 = vpop.permute.xlu0 %1264
        %v1266 = vsel %vm786, %v1263, 0
        %v1268 = vsel %vm786, %v1265, 0
        %1270 = vmatprep.subr.mxu0 0.0
        %1271 = vmatpush1.xpose.msra.mxu0 %v1268
        %1272 = vmatprep.subr.mxu0 0.0
        %1273 = vmatpush1.xpose.msra.mxu0 0.0
        %1274 = vmatprep.subr.mxu0 0.0
        %1275 = vmatpush1.xpose.msra.mxu0 0.0
        %1276 = vmatprep.subr.mxu0 0.0
        %1277 = vmatpush1.xpose.msra.mxu0 0.0
        %1278 = vmatprep.subr.mxu0 0.0
        %1279 = vmatpush1.xpose.msra.mxu0 0.0
        %1280 = vmatprep.subr.mxu0 0.0
        %1281 = vmatpush1.xpose.msra.mxu0 0.0
        %1282 = vmatprep.subr.mxu0 0.0
        %1283 = vmatpush1.xpose.msra.mxu0 0.0
        %1284 = vmatprep.subr.mxu0 0.0
        %1285 = vmatpush1.xpose.msra.mxu0 0.0
        %1286 = vmatprep.subr.mxu0 0.0
        %1287 = vmatpush1.xpose.msra.mxu0 0.0
        %1288 = vmatprep.subr.mxu0 0.0
        %1289 = vmatpush1.xpose.msra.mxu0 0.0
        %1290 = vmatprep.subr.mxu0 0.0
        %1291 = vmatpush1.xpose.msra.mxu0 0.0
        %1292 = vmatprep.subr.mxu0 0.0
        %1293 = vmatpush1.xpose.msra.mxu0 0.0
        %1294 = vmatprep.subr.mxu0 0.0
        %1295 = vmatpush1.xpose.msra.mxu0 0.0
        %1296 = vmatprep.subr.mxu0 0.0
        %1297 = vmatpush1.xpose.msra.mxu0 0.0
        %1298 = vmatprep.subr.mxu0 0.0
        %1299 = vmatpush1.xpose.msra.mxu0 0.0
        %1300 = vmatprep.subr.mxu0 0.0
        %1301 = vmatpush1.xpose.msra.mxu0 0.0
        %1302 = vmatprep.subr.mxu0 0.0
        %1303 = vmatpush1.xpose.msra.mxu0 0.0
        %1304 = vmatprep.subr.mxu0 0.0
        %1305 = vmatpush1.xpose.msra.mxu0 0.0
        %1306 = vmatprep.subr.mxu0 0.0
        %1307 = vmatpush1.xpose.msra.mxu0 0.0
        %1308 = vmatprep.subr.mxu0 0.0
        %1309 = vmatpush1.xpose.msra.mxu0 0.0
        %1310 = vmatprep.subr.mxu0 0.0
        %1311 = vmatpush1.xpose.msra.mxu0 0.0
        %1312 = vmatprep.subr.mxu0 0.0
        %1313 = vmatpush1.xpose.msra.mxu0 0.0
        %1314 = vmatprep.subr.mxu0 0.0
        %1315 = vmatpush1.xpose.msra.mxu0 0.0
        %1316 = vmatprep.subr.mxu0 0.0
        %1317 = vmatpush1.xpose.msra.mxu0 0.0
        %1318 = vmatprep.subr.mxu0 0.0
        %1319 = vmatpush1.xpose.msra.mxu0 0.0
        %1320 = vmatprep.subr.mxu0 0.0
        %1321 = vmatpush1.xpose.msra.mxu0 0.0
        %1322 = vmatprep.subr.mxu0 0.0
        %1323 = vmatpush1.xpose.msra.mxu0 0.0
        %1324 = vmatprep.subr.mxu0 0.0
        %1325 = vmatpush1.xpose.msra.mxu0 0.0
        %1326 = vmatprep.subr.mxu0 0.0
        %1327 = vmatpush1.xpose.msra.mxu0 0.0
        %1328 = vmatprep.subr.mxu0 0.0
        %1329 = vmatpush1.xpose.msra.mxu0 0.0
        %1330 = vmatprep.subr.mxu0 0.0
        %1331 = vmatpush1.xpose.msra.mxu0 0.0
        %1332 = vmatprep.subr.mxu0 0.0
        %1333 = vmatpush1.xpose.msra.mxu0 0.0
        %1334 = vmatprep.mubr.f32.mxu0 0.0
        %1335 = vmatmul.mubr.f32.gmra.mrb[0].mxu0 %v1266
        %v1336 = vpop.f32.mrb[0].mxu0
        %v1337 = vadd.f32 0.0, %v1336
        %v1338 = vpop.f32.mrb[0].mxu0
        %1339 = vdwg.mxu0
        %v1340 = vsel %vm786, %v1337, -inf
        %1341 = vmax.xlane.f32.xlu0 %v1340
        %v1342 = vpop.xlane.xlu0 %1341
        %v1343 = vsub.f32 %v1337, %v1342
        %v1344 = vmul.f32 %v1343, 1.442695
        %v1345 = vpow.pop %v1344
        %v1346 = vsel %vm786, %v1345, 0.0
        %1347 = vadd.xlane.f32.xlu0 %v1346
        %v1348 = vpop.xlane.xlu0 %1347
        %1349 = vrot.lane.b32.xlu0 %v783, 112
        %v1350 = vpop.permute.xlu0 %1349
        %v1353 = vsel %vm786, %v1345, 0
        %1355 = vmatprep.subr.mxu0 0.0
        %1356 = vmatpush1.msra.mxu0 %v1350
        %1357 = vmatprep.subr.mxu0 0.0
        %1358 = vmatpush1.msra.mxu0 0.0
        %1359 = vmatprep.subr.mxu0 0.0
        %1360 = vmatpush1.msra.mxu0 0.0
        %1361 = vmatprep.subr.mxu0 0.0
        %1362 = vmatpush1.msra.mxu0 0.0
        %1363 = vmatprep.subr.mxu0 0.0
        %1364 = vmatpush1.msra.mxu0 0.0
        %1365 = vmatprep.subr.mxu0 0.0
        %1366 = vmatpush1.msra.mxu0 0.0
        %1367 = vmatprep.subr.mxu0 0.0
        %1368 = vmatpush1.msra.mxu0 0.0
        %1369 = vmatprep.subr.mxu0 0.0
        %1370 = vmatpush1.msra.mxu0 0.0
        %1371 = vmatprep.subr.mxu0 0.0
        %1372 = vmatpush1.msra.mxu0 0.0
        %1373 = vmatprep.subr.mxu0 0.0
        %1374 = vmatpush1.msra.mxu0 0.0
        %1375 = vmatprep.subr.mxu0 0.0
        %1376 = vmatpush1.msra.mxu0 0.0
        %1377 = vmatprep.subr.mxu0 0.0
        %1378 = vmatpush1.msra.mxu0 0.0
        %1379 = vmatprep.subr.mxu0 0.0
        %1380 = vmatpush1.msra.mxu0 0.0
        %1381 = vmatprep.subr.mxu0 0.0
        %1382 = vmatpush1.msra.mxu0 0.0
        %1383 = vmatprep.subr.mxu0 0.0
        %1384 = vmatpush1.msra.mxu0 0.0
        %1385 = vmatprep.subr.mxu0 0.0
        %1386 = vmatpush1.msra.mxu0 0.0
        %1387 = vmatprep.subr.mxu0 0.0
        %1388 = vmatpush1.msra.mxu0 0.0
        %1389 = vmatprep.subr.mxu0 0.0
        %1390 = vmatpush1.msra.mxu0 0.0
        %1391 = vmatprep.subr.mxu0 0.0
        %1392 = vmatpush1.msra.mxu0 0.0
        %1393 = vmatprep.subr.mxu0 0.0
        %1394 = vmatpush1.msra.mxu0 0.0
        %1395 = vmatprep.subr.mxu0 0.0
        %1396 = vmatpush1.msra.mxu0 0.0
        %1397 = vmatprep.subr.mxu0 0.0
        %1398 = vmatpush1.msra.mxu0 0.0
        %1399 = vmatprep.subr.mxu0 0.0
        %1400 = vmatpush1.msra.mxu0 0.0
        %1401 = vmatprep.subr.mxu0 0.0
        %1402 = vmatpush1.msra.mxu0 0.0
        %1403 = vmatprep.subr.mxu0 0.0
        %1404 = vmatpush1.msra.mxu0 0.0
        %1405 = vmatprep.subr.mxu0 0.0
        %1406 = vmatpush1.msra.mxu0 0.0
        %1407 = vmatprep.subr.mxu0 0.0
        %1408 = vmatpush1.msra.mxu0 0.0
        %1409 = vmatprep.subr.mxu0 0.0
        %1410 = vmatpush1.msra.mxu0 0.0
        %1411 = vmatprep.subr.mxu0 0.0
        %1412 = vmatpush1.msra.mxu0 0.0
        %1413 = vmatprep.subr.mxu0 0.0
        %1414 = vmatpush1.msra.mxu0 0.0
        %1415 = vmatprep.subr.mxu0 0.0
        %1416 = vmatpush1.msra.mxu0 0.0
        %1417 = vmatprep.subr.mxu0 0.0
        %1418 = vmatpush1.msra.mxu0 0.0
        %1419 = vmatprep.mubr.f32.mxu0 0.0
        %1420 = vmatmul.mubr.f32.gmra.mrb[0].mxu0 %v1353
        %v1421 = vpop.f32.mrb[0].mxu0
        %v1422 = vadd.f32 0.0, %v1421
        %v1423 = vpop.f32.mrb[0].mxu0
        %1424 = vdwg.mxu0
        %v1425 = vrcp.pop %v1348
        %v1426 = vmul.f32 %v1422, %v1425
        %s1427 = scalar_lea.vmem %s9, 16
        %v1428 = vld [vmem:[%s1427] sm:$0xff]
        %v1430 = vsel %vm786, %v1426, 0
        %1432 = vmatprep.subr.mxu0 0.0
        %1433 = vmatpush1.msra.mxu0 %v1428
        %1434 = vmatprep.subr.mxu0 0.0
        %1435 = vmatpush1.msra.mxu0 0.0
        %1436 = vmatprep.subr.mxu0 0.0
        %1437 = vmatpush1.msra.mxu0 0.0
        %1438 = vmatprep.subr.mxu0 0.0
        %1439 = vmatpush1.msra.mxu0 0.0
        %1440 = vmatprep.subr.mxu0 0.0
        %1441 = vmatpush1.msra.mxu0 0.0
        %1442 = vmatprep.subr.mxu0 0.0
        %1443 = vmatpush1.msra.mxu0 0.0
        %1444 = vmatprep.subr.mxu0 0.0
        %1445 = vmatpush1.msra.mxu0 0.0
        %1446 = vmatprep.subr.mxu0 0.0
        %1447 = vmatpush1.msra.mxu0 0.0
        %1448 = vmatprep.subr.mxu0 0.0
        %1449 = vmatpush1.msra.mxu0 0.0
        %1450 = vmatprep.subr.mxu0 0.0
        %1451 = vmatpush1.msra.mxu0 0.0
        %1452 = vmatprep.subr.mxu0 0.0
        %1453 = vmatpush1.msra.mxu0 0.0
        %1454 = vmatprep.subr.mxu0 0.0
        %1455 = vmatpush1.msra.mxu0 0.0
        %1456 = vmatprep.subr.mxu0 0.0
        %1457 = vmatpush1.msra.mxu0 0.0
        %1458 = vmatprep.subr.mxu0 0.0
        %1459 = vmatpush1.msra.mxu0 0.0
        %1460 = vmatprep.subr.mxu0 0.0
        %1461 = vmatpush1.msra.mxu0 0.0
        %1462 = vmatprep.subr.mxu0 0.0
        %1463 = vmatpush1.msra.mxu0 0.0
        %1464 = vmatprep.subr.mxu0 0.0
        %1465 = vmatpush1.msra.mxu0 0.0
        %1466 = vmatprep.subr.mxu0 0.0
        %1467 = vmatpush1.msra.mxu0 0.0
        %1468 = vmatprep.subr.mxu0 0.0
        %1469 = vmatpush1.msra.mxu0 0.0
        %1470 = vmatprep.subr.mxu0 0.0
        %1471 = vmatpush1.msra.mxu0 0.0
        %1472 = vmatprep.subr.mxu0 0.0
        %1473 = vmatpush1.msra.mxu0 0.0
        %1474 = vmatprep.subr.mxu0 0.0
        %1475 = vmatpush1.msra.mxu0 0.0
        %1476 = vmatprep.subr.mxu0 0.0
        %1477 = vmatpush1.msra.mxu0 0.0
        %1478 = vmatprep.subr.mxu0 0.0
        %1479 = vmatpush1.msra.mxu0 0.0
        %1480 = vmatprep.subr.mxu0 0.0
        %1481 = vmatpush1.msra.mxu0 0.0
        %1482 = vmatprep.subr.mxu0 0.0
        %1483 = vmatpush1.msra.mxu0 0.0
        %1484 = vmatprep.subr.mxu0 0.0
        %1485 = vmatpush1.msra.mxu0 0.0
        %1486 = vmatprep.subr.mxu0 0.0
        %1487 = vmatpush1.msra.mxu0 0.0
        %1488 = vmatprep.subr.mxu0 0.0
        %1489 = vmatpush1.msra.mxu0 0.0
        %1490 = vmatprep.subr.mxu0 0.0
        %1491 = vmatpush1.msra.mxu0 0.0
        %1492 = vmatprep.subr.mxu0 0.0
        %1493 = vmatpush1.msra.mxu0 0.0
        %1494 = vmatprep.subr.mxu0 0.0
        %1495 = vmatpush1.msra.mxu0 0.0
        %1496 = vmatprep.mubr.f32.mxu0 0.0
        %1497 = vmatmul.mubr.f32.gmra.mrb[0].mxu0 %v1430
        %v1498 = vpop.f32.mrb[0].mxu0
        %v1499 = vadd.f32 0.0, %v1498
        %v1500 = vpop.f32.mrb[0].mxu0
        %1501 = vdwg.mxu0
        %v1502 = vadd.f32 %v1259, %v1499
        %1503 = vrot.lane.b32.xlu0 %v617, 104
        %v1504 = vpop.permute.xlu0 %1503
        %1505 = vrot.lane.b32.xlu0 %v699, 104
        %v1506 = vpop.permute.xlu0 %1505
        %v1507 = vsel %vm786, %v1504, 0
        %v1509 = vsel %vm786, %v1506, 0
        %1511 = vmatprep.subr.mxu0 0.0
        %1512 = vmatpush1.xpose.msra.mxu0 %v1509
        %1513 = vmatprep.subr.mxu0 0.0
        %1514 = vmatpush1.xpose.msra.mxu0 0.0
        %1515 = vmatprep.subr.mxu0 0.0
        %1516 = vmatpush1.xpose.msra.mxu0 0.0
        %1517 = vmatprep.subr.mxu0 0.0
        %1518 = vmatpush1.xpose.msra.mxu0 0.0
        %1519 = vmatprep.subr.mxu0 0.0
        %1520 = vmatpush1.xpose.msra.mxu0 0.0
        %1521 = vmatprep.subr.mxu0 0.0
        %1522 = vmatpush1.xpose.msra.mxu0 0.0
        %1523 = vmatprep.subr.mxu0 0.0
        %1524 = vmatpush1.xpose.msra.mxu0 0.0
        %1525 = vmatprep.subr.mxu0 0.0
        %1526 = vmatpush1.xpose.msra.mxu0 0.0
        %1527 = vmatprep.subr.mxu0 0.0
        %1528 = vmatpush1.xpose.msra.mxu0 0.0
        %1529 = vmatprep.subr.mxu0 0.0
        %1530 = vmatpush1.xpose.msra.mxu0 0.0
        %1531 = vmatprep.subr.mxu0 0.0
        %1532 = vmatpush1.xpose.msra.mxu0 0.0
        %1533 = vmatprep.subr.mxu0 0.0
        %1534 = vmatpush1.xpose.msra.mxu0 0.0
        %1535 = vmatprep.subr.mxu0 0.0
        %1536 = vmatpush1.xpose.msra.mxu0 0.0
        %1537 = vmatprep.subr.mxu0 0.0
        %1538 = vmatpush1.xpose.msra.mxu0 0.0
        %1539 = vmatprep.subr.mxu0 0.0
        %1540 = vmatpush1.xpose.msra.mxu0 0.0
        %1541 = vmatprep.subr.mxu0 0.0
        %1542 = vmatpush1.xpose.msra.mxu0 0.0
        %1543 = vmatprep.subr.mxu0 0.0
        %1544 = vmatpush1.xpose.msra.mxu0 0.0
        %1545 = vmatprep.subr.mxu0 0.0
        %1546 = vmatpush1.xpose.msra.mxu0 0.0
        %1547 = vmatprep.subr.mxu0 0.0
        %1548 = vmatpush1.xpose.msra.mxu0 0.0
        %1549 = vmatprep.subr.mxu0 0.0
        %1550 = vmatpush1.xpose.msra.mxu0 0.0
        %1551 = vmatprep.subr.mxu0 0.0
        %1552 = vmatpush1.xpose.msra.mxu0 0.0
        %1553 = vmatprep.subr.mxu0 0.0
        %1554 = vmatpush1.xpose.msra.mxu0 0.0
        %1555 = vmatprep.subr.mxu0 0.0
        %1556 = vmatpush1.xpose.msra.mxu0 0.0
        %1557 = vmatprep.subr.mxu0 0.0
        %1558 = vmatpush1.xpose.msra.mxu0 0.0
        %1559 = vmatprep.subr.mxu0 0.0
        %1560 = vmatpush1.xpose.msra.mxu0 0.0
        %1561 = vmatprep.subr.mxu0 0.0
        %1562 = vmatpush1.xpose.msra.mxu0 0.0
        %1563 = vmatprep.subr.mxu0 0.0
        %1564 = vmatpush1.xpose.msra.mxu0 0.0
        %1565 = vmatprep.subr.mxu0 0.0
        %1566 = vmatpush1.xpose.msra.mxu0 0.0
        %1567 = vmatprep.subr.mxu0 0.0
        %1568 = vmatpush1.xpose.msra.mxu0 0.0
        %1569 = vmatprep.subr.mxu0 0.0
        %1570 = vmatpush1.xpose.msra.mxu0 0.0
        %1571 = vmatprep.subr.mxu0 0.0
        %1572 = vmatpush1.xpose.msra.mxu0 0.0
        %1573 = vmatprep.subr.mxu0 0.0
        %1574 = vmatpush1.xpose.msra.mxu0 0.0
        %1575 = vmatprep.mubr.f32.mxu0 0.0
        %1576 = vmatmul.mubr.f32.gmra.mrb[0].mxu0 %v1507
        %v1577 = vpop.f32.mrb[0].mxu0
        %v1578 = vadd.f32 0.0, %v1577
        %v1579 = vpop.f32.mrb[0].mxu0
        %1580 = vdwg.mxu0
        %v1581 = vsel %vm786, %v1578, -inf
        %1582 = vmax.xlane.f32.xlu0 %v1581
        %v1583 = vpop.xlane.xlu0 %1582
        %v1584 = vsub.f32 %v1578, %v1583
        %v1585 = vmul.f32 %v1584, 1.442695
        %v1586 = vpow.pop %v1585
        %v1587 = vsel %vm786, %v1586, 0.0
        %1588 = vadd.xlane.f32.xlu0 %v1587
        %v1589 = vpop.xlane.xlu0 %1588
        %1590 = vrot.lane.b32.xlu0 %v783, 104
        %v1591 = vpop.permute.xlu0 %1590
        %v1594 = vsel %vm786, %v1586, 0
        %1596 = vmatprep.subr.mxu0 0.0
        %1597 = vmatpush1.msra.mxu0 %v1591
        %1598 = vmatprep.subr.mxu0 0.0
        %1599 = vmatpush1.msra.mxu0 0.0
        %1600 = vmatprep.subr.mxu0 0.0
        %1601 = vmatpush1.msra.mxu0 0.0
        %1602 = vmatprep.subr.mxu0 0.0
        %1603 = vmatpush1.msra.mxu0 0.0
        %1604 = vmatprep.subr.mxu0 0.0
        %1605 = vmatpush1.msra.mxu0 0.0
        %1606 = vmatprep.subr.mxu0 0.0
        %1607 = vmatpush1.msra.mxu0 0.0
        %1608 = vmatprep.subr.mxu0 0.0
        %1609 = vmatpush1.msra.mxu0 0.0
        %1610 = vmatprep.subr.mxu0 0.0
        %1611 = vmatpush1.msra.mxu0 0.0
        %1612 = vmatprep.subr.mxu0 0.0
        %1613 = vmatpush1.msra.mxu0 0.0
        %1614 = vmatprep.subr.mxu0 0.0
        %1615 = vmatpush1.msra.mxu0 0.0
        %1616 = vmatprep.subr.mxu0 0.0
        %1617 = vmatpush1.msra.mxu0 0.0
        %1618 = vmatprep.subr.mxu0 0.0
        %1619 = vmatpush1.msra.mxu0 0.0
        %1620 = vmatprep.subr.mxu0 0.0
        %1621 = vmatpush1.msra.mxu0 0.0
        %1622 = vmatprep.subr.mxu0 0.0
        %1623 = vmatpush1.msra.mxu0 0.0
        %1624 = vmatprep.subr.mxu0 0.0
        %1625 = vmatpush1.msra.mxu0 0.0
        %1626 = vmatprep.subr.mxu0 0.0
        %1627 = vmatpush1.msra.mxu0 0.0
        %1628 = vmatprep.subr.mxu0 0.0
        %1629 = vmatpush1.msra.mxu0 0.0
        %1630 = vmatprep.subr.mxu0 0.0
        %1631 = vmatpush1.msra.mxu0 0.0
        %1632 = vmatprep.subr.mxu0 0.0
        %1633 = vmatpush1.msra.mxu0 0.0
        %1634 = vmatprep.subr.mxu0 0.0
        %1635 = vmatpush1.msra.mxu0 0.0
        %1636 = vmatprep.subr.mxu0 0.0
        %1637 = vmatpush1.msra.mxu0 0.0
        %1638 = vmatprep.subr.mxu0 0.0
        %1639 = vmatpush1.msra.mxu0 0.0
        %1640 = vmatprep.subr.mxu0 0.0
        %1641 = vmatpush1.msra.mxu0 0.0
        %1642 = vmatprep.subr.mxu0 0.0
        %1643 = vmatpush1.msra.mxu0 0.0
        %1644 = vmatprep.subr.mxu0 0.0
        %1645 = vmatpush1.msra.mxu0 0.0
        %1646 = vmatprep.subr.mxu0 0.0
        %1647 = vmatpush1.msra.mxu0 0.0
        %1648 = vmatprep.subr.mxu0 0.0
        %1649 = vmatpush1.msra.mxu0 0.0
        %1650 = vmatprep.subr.mxu0 0.0
        %1651 = vmatpush1.msra.mxu0 0.0
        %1652 = vmatprep.subr.mxu0 0.0
        %1653 = vmatpush1.msra.mxu0 0.0
        %1654 = vmatprep.subr.mxu0 0.0
        %1655 = vmatpush1.msra.mxu0 0.0
        %1656 = vmatprep.subr.mxu0 0.0
        %1657 = vmatpush1.msra.mxu0 0.0
        %1658 = vmatprep.subr.mxu0 0.0
        %1659 = vmatpush1.msra.mxu0 0.0
        %1660 = vmatprep.mubr.f32.mxu0 0.0
        %1661 = vmatmul.mubr.f32.gmra.mrb[0].mxu0 %v1594
        %v1662 = vpop.f32.mrb[0].mxu0
        %v1663 = vadd.f32 0.0, %v1662
        %v1664 = vpop.f32.mrb[0].mxu0
        %1665 = vdwg.mxu0
        %v1666 = vrcp.pop %v1589
        %v1667 = vmul.f32 %v1663, %v1666
        %s1668 = scalar_lea.vmem %s9, 24
        %v1669 = vld [vmem:[%s1668] sm:$0xff]
        %v1671 = vsel %vm786, %v1667, 0
        %1673 = vmatprep.subr.mxu0 0.0
        %1674 = vmatpush1.msra.mxu0 %v1669
        %1675 = vmatprep.subr.mxu0 0.0
        %1676 = vmatpush1.msra.mxu0 0.0
        %1677 = vmatprep.subr.mxu0 0.0
        %1678 = vmatpush1.msra.mxu0 0.0
        %1679 = vmatprep.subr.mxu0 0.0
        %1680 = vmatpush1.msra.mxu0 0.0
        %1681 = vmatprep.subr.mxu0 0.0
        %1682 = vmatpush1.msra.mxu0 0.0
        %1683 = vmatprep.subr.mxu0 0.0
        %1684 = vmatpush1.msra.mxu0 0.0
        %1685 = vmatprep.subr.mxu0 0.0
        %1686 = vmatpush1.msra.mxu0 0.0
        %1687 = vmatprep.subr.mxu0 0.0
        %1688 = vmatpush1.msra.mxu0 0.0
        %1689 = vmatprep.subr.mxu0 0.0
        %1690 = vmatpush1.msra.mxu0 0.0
        %1691 = vmatprep.subr.mxu0 0.0
        %1692 = vmatpush1.msra.mxu0 0.0
        %1693 = vmatprep.subr.mxu0 0.0
        %1694 = vmatpush1.msra.mxu0 0.0
        %1695 = vmatprep.subr.mxu0 0.0
        %1696 = vmatpush1.msra.mxu0 0.0
        %1697 = vmatprep.subr.mxu0 0.0
        %1698 = vmatpush1.msra.mxu0 0.0
        %1699 = vmatprep.subr.mxu0 0.0
        %1700 = vmatpush1.msra.mxu0 0.0
        %1701 = vmatprep.subr.mxu0 0.0
        %1702 = vmatpush1.msra.mxu0 0.0
        %1703 = vmatprep.subr.mxu0 0.0
        %1704 = vmatpush1.msra.mxu0 0.0
        %1705 = vmatprep.subr.mxu0 0.0
        %1706 = vmatpush1.msra.mxu0 0.0
        %1707 = vmatprep.subr.mxu0 0.0
        %1708 = vmatpush1.msra.mxu0 0.0
        %1709 = vmatprep.subr.mxu0 0.0
        %1710 = vmatpush1.msra.mxu0 0.0
        %1711 = vmatprep.subr.mxu0 0.0
        %1712 = vmatpush1.msra.mxu0 0.0
        %1713 = vmatprep.subr.mxu0 0.0
        %1714 = vmatpush1.msra.mxu0 0.0
        %1715 = vmatprep.subr.mxu0 0.0
        %1716 = vmatpush1.msra.mxu0 0.0
        %1717 = vmatprep.subr.mxu0 0.0
        %1718 = vmatpush1.msra.mxu0 0.0
        %1719 = vmatprep.subr.mxu0 0.0
        %1720 = vmatpush1.msra.mxu0 0.0
        %1721 = vmatprep.subr.mxu0 0.0
        %1722 = vmatpush1.msra.mxu0 0.0
        %1723 = vmatprep.subr.mxu0 0.0
        %1724 = vmatpush1.msra.mxu0 0.0
        %1725 = vmatprep.subr.mxu0 0.0
        %1726 = vmatpush1.msra.mxu0 0.0
        %1727 = vmatprep.subr.mxu0 0.0
        %1728 = vmatpush1.msra.mxu0 0.0
        %1729 = vmatprep.subr.mxu0 0.0
        %1730 = vmatpush1.msra.mxu0 0.0
        %1731 = vmatprep.subr.mxu0 0.0
        %1732 = vmatpush1.msra.mxu0 0.0
        %1733 = vmatprep.subr.mxu0 0.0
        %1734 = vmatpush1.msra.mxu0 0.0
        %1735 = vmatprep.subr.mxu0 0.0
        %1736 = vmatpush1.msra.mxu0 0.0
        %1737 = vmatprep.mubr.f32.mxu0 0.0
        %1738 = vmatmul.mubr.f32.gmra.mrb[0].mxu0 %v1671
        %v1739 = vpop.f32.mrb[0].mxu0
        %v1740 = vadd.f32 0.0, %v1739
        %v1741 = vpop.f32.mrb[0].mxu0
        %1742 = vdwg.mxu0
        %v1743 = vadd.f32 %v1502, %v1740
        %v1744 = vld [vmem:[%s10] sm:$0x1]
        %v1746 = vlaneseq
        %v1747 = vshrl.u32 %v1746, 7
        %v1748 = vsub.s32 0, %v1747
        %v1749 = vrot.slane %v1744, %v1748
        %v1751 = vadd.f32 %v1743, %v1749
        %1752 = vst.msk [vmem:[%s528] sm:$0xff] %vm543, %v1751
        %s1753 = sand.u32 %s287, 1
        %s1754 = scalar_lea.sflag [#allocation4], %s1753
        %s1755 = sand.u32 %s287, 1
        %s1756 = smul.addr %s1755, 8
        %s1757 = scalar_lea.vmem [#allocation14], %s1756
        // Predicated region
        $region93: #{tpu_custom_call.1} parent=63 // pred_check
          %p1758 = pneg %p297
        $region94: #{tpu_custom_call.1} parent=63 // pred_check_branch
          %1760 = sbr.rel (%p1758) target = $region96
        $region95: #{tpu_custom_call.1} parent=63 // pred_region
          %s1762 = ssub.s32 128, 128
          %1763 = vsyncadd %s1754, %s1762
          %s1764 = smul.addr %s33, 128
          %s1765 = scalar_lea.hbm %s11, %s1764
          %s1767 = sshll.u32 %s1757, 4
          %s1768 = int_to_ptr.vmem [resolvable:$true] %s1767
          %1770 = dma.vmem_to_hbm [thread:$0]  %s1768, 128, %s1765, %s1754
        $region96: #{tpu_custom_call.1} parent=63 // pred_fallthru
          _
      $region64: #{tpu_custom_call.1} parent=5 // pred_fallthru
        _
      %p1771 = scmp.le.s32.totalorder 2, %s28
      // Predicated region
      $region97: #{tpu_custom_call.1} parent=5 // pred_check
        %p1772 = pneg %p1771
      $region98: #{tpu_custom_call.1} parent=5 // pred_check_branch
        %1774 = sbr.rel (%p1772) target = $region100
      $region99: #{tpu_custom_call.1} parent=5 // pred_region
        %s1775 = ssub.s32 %s28, 2
        // Predicated region
        $region101: #{tpu_custom_call.1} parent=99 // pred_check
          %p1776 = pneg %p303
        $region102: #{tpu_custom_call.1} parent=99 // pred_check_branch
          %1778 = sbr.rel (%p1776) target = $region104
        $region103: #{tpu_custom_call.1} parent=99 // pred_region
          %s1779 = sand.u32 %s288, 1
          %s1780 = scalar_lea.sflag [#allocation4], %s1779
          %s1781 = sand.u32 %s288, 1
          %s1782 = smul.addr %s1781, 8
          %s1783 = scalar_lea.vmem [#allocation14], %s1782
          %1784 = dma.done %s1780, 128
        $region104: #{tpu_custom_call.1} parent=99 // pred_fallthru
          _
      $region100: #{tpu_custom_call.1} parent=5 // pred_fallthru
        _
    $region6: #{tpu_custom_call.1} parent=1 // loop_footer
      %s32 = sadd.s32 1, %s28
    $region7: #{tpu_custom_call.1} parent=1 // loop_footer_branch
      %27 = sbr.rel target = $region3
    $region8: #{tpu_custom_call.1} parent=1 // loop_exit
      _
    %1785 = vsyncpa [#allocation3], 1
    %s1786 = scalar_lea.sflag [#allocation3], 1
    %1787 = vsyncpa %s1786, 1
    %1788 = vsyncpa [#allocation6], 1
    %s1789 = scalar_lea.sflag [#allocation6], 1
    %1790 = vsyncpa %s1789, 1
    %1791 = vsyncpa [#allocation9], 1
    %1792 = vsyncpa [#allocation12], 1
    %1793 = vsyncpa [#allocation4], 1
    %s1794 = scalar_lea.sflag [#allocation4], 1
    %1795 = vsyncpa %s1794, 1

</llo_original>
